<compile_context>
chip_gen: v5e
topology: v5e:2x2
jax: 0.10.0
libtpu: 0.0.40
codegen_flags: <defaults>
</compile_context>

<pallas_src>
import jax
import jax.numpy as jnp
from jax.experimental import pallas as pl
from jax.experimental.pallas import tpu as pltpu

IN_FEATURES = 1152
OUT_FEATURES = 6

# Sublane packing multiple per element size (bytes) for the second-to-last
# block dim when the block does not cover the full array extent.
_SUBLANE_MULTIPLE = {4: 8, 2: 16, 1: 32}


def _default_block_b():
    """Generation-aware default batch tile (rows of x per grid step)."""
    try:
        kind = jax.devices()[0].device_kind.lower()
    except Exception:  # no devices visible at import/trace time
        return 1024
    if "v6" in kind or "v7" in kind:
        # 32 MiB default scoped VMEM -> 2048-row f32 tiles fit comfortably.
        return 2048
    # v5e (16 MiB default scoped VMEM) and anything unknown: stay at 1024.
    return 1024


def _choose_block_b(batch, requested, dtype):
    """Pick a batch tile satisfying the sublane-packing block constraint."""
    tb = min(requested, batch)
    if tb != batch:
        m = _SUBLANE_MULTIPLE.get(jnp.dtype(dtype).itemsize, 8)
        tb = max(m, (tb // m) * m)
    return tb


def _linear_kernel(x_ref, w_ref, b_ref, o_ref):
    # One row-tile of the Linear layer: (TB, 1152) @ (1152, 6) + (1, 6).
    acc = jnp.dot(
        x_ref[...],
        w_ref[...],
        preferred_element_type=jnp.float32,
        precision=jax.lax.Precision.HIGHEST,  # parity with torch f32 Linear
    )
    o_ref[...] = (acc + b_ref[...]).astype(o_ref.dtype)


def prepare_params(weight, bias):
    """Convert torch-layout params once: (6,1152),(6,) -> (1152,6),(1,6)."""
    return weight.T, bias.reshape(1, OUT_FEATURES)


def lr_har_forward(x, w_t, b2, *, block_b=None):
    """Forward pass of LR_har.

    x:   (B, 1152)
    w_t: (1152, 6)   -- weight already transposed (see prepare_params)
    b2:  (1, 6)      -- bias already reshaped     (see prepare_params)
    Returns (B, 6), same dtype as x.
    """
    B = x.shape[0]
    if block_b is None:
        block_b = _default_block_b()
    tb = _choose_block_b(B, block_b, x.dtype)
    grid = (pl.cdiv(B, tb),)

    itemsize = jnp.dtype(x.dtype).itemsize
    w_itemsize = jnp.dtype(w_t.dtype).itemsize
    cost = pl.CostEstimate(
        flops=2 * B * IN_FEATURES * OUT_FEATURES,
        transcendentals=0,
        bytes_accessed=(B * IN_FEATURES * itemsize                 # read x
                        + IN_FEATURES * OUT_FEATURES * w_itemsize  # read W
                        + OUT_FEATURES * w_itemsize                # read b
                        + B * OUT_FEATURES * itemsize),            # write out
    )

    # Larger-than-1024 tiles can exceed the 16/32 MiB default scoped-VMEM
    # accounting; raise the limit explicitly (still far below physical VMEM
    # on every generation, incl. v7x's 64 MiB/TC).
    vmem_limit = (48 << 20) if tb > 1024 else None

    return pl.pallas_call(
        _linear_kernel,
        out_shape=jax.ShapeDtypeStruct((B, OUT_FEATURES), x.dtype),
        grid=grid,
        in_specs=[
            # Streamed: one row-tile of x per grid step (double-buffered).
            pl.BlockSpec((tb, IN_FEATURES), lambda i: (i, 0)),
            # Resident: same weight / bias block for every grid step.
            pl.BlockSpec((IN_FEATURES, OUT_FEATURES), lambda i: (0, 0)),
            pl.BlockSpec((1, OUT_FEATURES), lambda i: (0, 0)),
        ],
        out_specs=pl.BlockSpec((tb, OUT_FEATURES), lambda i: (i, 0)),
        compiler_params=pltpu.CompilerParams(
            # Row-blocks are independent (no cross-iteration accumulator), so
            # the batch axis is parallel -> eligible for megacore split.
            dimension_semantics=("parallel",),
            vmem_limit_bytes=vmem_limit,
        ),
        cost_estimate=cost,
    )(x, w_t, b2)


def init_params(key):
    # Deterministic init mimicking torch nn.Linear default:
    # U(-1/sqrt(fan_in), 1/sqrt(fan_in)), torch layout (out, in) / (out,).
    kw, kb = jax.random.split(key)
    bound = 1.0 / jnp.sqrt(jnp.float32(IN_FEATURES))
    weight = jax.random.uniform(
        kw, (OUT_FEATURES, IN_FEATURES), jnp.float32, -bound, bound)
    bias = jax.random.uniform(
        kb, (OUT_FEATURES,), jnp.float32, -bound, bound)
    return weight, bias


def _reference(x, w_t, b2):
    return jnp.dot(x, w_t, precision=jax.lax.Precision.HIGHEST) + b2


if __name__ == "__main__":
    key = jax.random.PRNGKey(0)
    kx, kp, kx2 = jax.random.split(key, 3)
    weight, bias = init_params(kp)
    w_t, b2 = prepare_params(weight, bias)   # hoisted out of the forward path

    # 1) Small demo batch (single grid step; tile clamps to B).
    B = 8
    x = jax.random.normal(kx, (B, IN_FEATURES), jnp.float32)
    out = lr_har_forward(x, w_t, b2)
    out = jax.block_until_ready(out)
    ref = _reference(x, w_t, b2)
    assert out.shape == (B, OUT_FEATURES)
    assert jnp.allclose(out, ref, atol=1e-4, rtol=1e-4)

    # 2) Multi-tile case with a partial last tile (B=20, TB=8 -> grid=3),
    #    verifying padded rows never corrupt valid output rows.
    B2 = 20
    x2 = jax.random.normal(kx2, (B2, IN_FEATURES), jnp.float32)
    out2 = lr_har_forward(x2, w_t, b2, block_b=8)
    out2 = jax.block_until_ready(out2)
    ref2 = _reference(x2, w_t, b2)
    assert out2.shape == (B2, OUT_FEATURES)
    assert jnp.allclose(out2, ref2, atol=1e-4, rtol=1e-4)

    print("KERNEL_OK")
</pallas_src>

<mosaic_0001>
module attributes {stable_mosaic.version = 11 : i64} {
  func.func @_linear_kernel(%arg0: i32, %arg1: memref<8x1152xf32, #tpu.memory_space<vmem>>, %arg2: memref<1152x6xf32, #tpu.memory_space<vmem>>, %arg3: memref<1x6xf32, #tpu.memory_space<vmem>>, %arg4: memref<8x6xf32, #tpu.memory_space<vmem>>) attributes {dimension_semantics = [#tpu.dimension_semantics<parallel>], iteration_bounds = array<i64: 1>, scalar_prefetch = 0 : i64, scratch_operands = 0 : i64, tpu.core_type = #tpu.core_type<tc>, window_params = [{transform_indices = @transform_0, window_bounds = array<i64: 8, 1152>}, {pipeline_mode = #tpu.pipeline_mode<synchronous>, transform_indices = @transform_1, window_bounds = array<i64: 1152, 6>}, {pipeline_mode = #tpu.pipeline_mode<synchronous>, transform_indices = @transform_2, window_bounds = array<i64: 1, 6>}, {transform_indices = @transform_3, window_bounds = array<i64: 8, 6>}]} {
    %c0 = arith.constant 0 : index
    %c0_0 = arith.constant 0 : index
    %0 = vector.load %arg1[%c0, %c0_0] : memref<8x1152xf32, #tpu.memory_space<vmem>>, vector<8x1152xf32>
    %c0_1 = arith.constant 0 : index
    %c0_2 = arith.constant 0 : index
    %1 = vector.load %arg2[%c0_1, %c0_2] : memref<1152x6xf32, #tpu.memory_space<vmem>>, vector<1152x6xf32>
    %cst = arith.constant dense<0.000000e+00> : vector<8x6xf32>
    %2 = tpu.matmul %0, %1, %cst {dimension_numbers = #tpu.dot_dimension_numbers<[1], [0], [0], [1], [0, 0, 1, 1], [], []>, precision = #tpu.contract_precision<fp32>} : vector<8x1152xf32>, vector<1152x6xf32>, vector<8x6xf32> -> vector<8x6xf32>
    %c0_3 = arith.constant 0 : index
    %c0_4 = arith.constant 0 : index
    %3 = vector.load %arg3[%c0_3, %c0_4] : memref<1x6xf32, #tpu.memory_space<vmem>>, vector<1x6xf32>
    %4 = vector.broadcast %3 : vector<1x6xf32> to vector<8x6xf32>
    %5 = arith.addf %2, %4 : vector<8x6xf32>
    %c0_5 = arith.constant 0 : index
    %c0_6 = arith.constant 0 : index
    %6 = vector.load %arg4[%c0_5, %c0_6] : memref<8x6xf32, #tpu.memory_space<vmem>>, vector<8x6xf32>
    tpu.vector_store %arg4[%c0_5, %c0_6], %5 {strides = array<i32>} : memref<8x6xf32, #tpu.memory_space<vmem>>, vector<8x6xf32>,
    return
  }
  func.func @transform_0(%arg0: i32) -> (i32, i32) {
    %c0_i32 = arith.constant 0 : i32
    %c0_i32_0 = arith.constant 0 : i32
    return %arg0, %c0_i32 : i32, i32
  }
  func.func @transform_1(%arg0: i32) -> (i32, i32) {
    %c0_i32 = arith.constant 0 : i32
    %c0_i32_0 = arith.constant 0 : i32
    %c0_i32_1 = arith.constant 0 : i32
    return %c0_i32, %c0_i32_0 : i32, i32
  }
  func.func @transform_2(%arg0: i32) -> (i32, i32) {
    %c0_i32 = arith.constant 0 : i32
    %c0_i32_0 = arith.constant 0 : i32
    %c0_i32_1 = arith.constant 0 : i32
    return %c0_i32, %c0_i32_0 : i32, i32
  }
  func.func @transform_3(%arg0: i32) -> (i32, i32) {
    %c0_i32 = arith.constant 0 : i32
    %c0_i32_0 = arith.constant 0 : i32
    return %arg0, %c0_i32 : i32, i32
  }
}

</mosaic_0001>

<llo_original>
// kernel: tpu_custom_call.1
$region0: #{tpu_custom_call.1}
  #allocation0 [shape = 'u32[]', space=smem, size = 0x4, offset = 0x4, fixed_abs, tag = 'smem constant byte address 0x4 - core index']
  #allocation1 [shape = 'u32[72,128]{1,0:T(1,128)}', space=vmem, size = 0x9000, scoped, tag = 'internal scratch']
  %s0 = inlined_call_operand.vmem [shape: f32[8,1152], index: 0, kind: input, shape index: {}]
  %s1 = inlined_call_operand.vmem [shape: f32[1152,6], index: 1, kind: input, shape index: {}]
  %s2 = inlined_call_operand.vmem [shape: f32[1,6], index: 2, kind: input, shape index: {}]
  %s3 = inlined_call_operand.hbm [shape: f32[8,6], index: 3, kind: output, shape index: {}]
  %s4 = sld [smem:[#allocation0]]
  $region22: #{tpu_custom_call.1} parent=0
    _
  %s6 = ssub.s32 1, %s4
  %s7 = scalar_select 0, %s6, %s4
  $region1: #{tpu_custom_call.1} parent=0
    #allocation2 [shape = 'u8[4096]{0}', space=vmem, size = 0x1000, scoped, tag = 'output window, operand 0, single buffered']
    #allocation3 [shape = 's32[1]{0}', space=sflag, size = 0x4, scoped, tag = 'scoped memory for tpu_custom_call.1']
    %8 = vsyncpa [#allocation3], 0
    // Predicated region
    $region2: #{tpu_custom_call.1} parent=1 // pred_check
      _
    $region3: #{tpu_custom_call.1} parent=1 // pred_check_branch
      %10 = sbr.rel (0) target = $region5
    $region4: #{tpu_custom_call.1} parent=1 // pred_region
      _
    $region5: #{tpu_custom_call.1} parent=1 // pred_fallthru
      _
    // Predicated region
    $region6: #{tpu_custom_call.1} parent=1 // pred_check
      _
    $region7: #{tpu_custom_call.1} parent=1 // pred_check_branch
      %12 = sbr.rel (0) target = $region9
    $region8: #{tpu_custom_call.1} parent=1 // pred_region
      _
    $region9: #{tpu_custom_call.1} parent=1 // pred_fallthru
      _
    // Predicated region
    $region10: #{tpu_custom_call.1} parent=1 // pred_check
      _
    $region11: #{tpu_custom_call.1} parent=1 // pred_check_branch
      %14 = sbr.rel (0) target = $region13
    $region12: #{tpu_custom_call.1} parent=1 // pred_region
      _
    $region13: #{tpu_custom_call.1} parent=1 // pred_fallthru
      _
    %v15 = vld [vmem:[%s0] sm:$0xff]
    %v16 = vld [vmem:[%s0 + $0x8] sm:$0xff]
    %v17 = vld [vmem:[%s0 + $0x10] sm:$0xff]
    %v18 = vld [vmem:[%s0 + $0x18] sm:$0xff]
    %v19 = vld [vmem:[%s0 + $0x20] sm:$0xff]
    %v20 = vld [vmem:[%s0 + $0x28] sm:$0xff]
    %v21 = vld [vmem:[%s0 + $0x30] sm:$0xff]
    %v22 = vld [vmem:[%s0 + $0x38] sm:$0xff]
    %v23 = vld [vmem:[%s0 + $0x40] sm:$0xff]
    %v24 = vld [vmem:[%s1] sm:$0xff]
    %v25 = vld [vmem:[%s1 + $0x8] sm:$0xff]
    %v26 = vld [vmem:[%s1 + $0x10] sm:$0xff]
    %v27 = vld [vmem:[%s1 + $0x18] sm:$0xff]
    %v28 = vld [vmem:[%s1 + $0x20] sm:$0xff]
    %v29 = vld [vmem:[%s1 + $0x28] sm:$0xff]
    %v30 = vld [vmem:[%s1 + $0x30] sm:$0xff]
    %v31 = vld [vmem:[%s1 + $0x38] sm:$0xff]
    %v32 = vld [vmem:[%s1 + $0x40] sm:$0xff]
    %v33 = vld [vmem:[%s1 + $0x48] sm:$0xff]
    %v34 = vld [vmem:[%s1 + $0x50] sm:$0xff]
    %v35 = vld [vmem:[%s1 + $0x58] sm:$0xff]
    %v36 = vld [vmem:[%s1 + $0x60] sm:$0xff]
    %v37 = vld [vmem:[%s1 + $0x68] sm:$0xff]
    %v38 = vld [vmem:[%s1 + $0x70] sm:$0xff]
    %v39 = vld [vmem:[%s1 + $0x78] sm:$0xff]
    %v40 = vld [vmem:[%s1 + $0x80] sm:$0xff]
    %v41 = vld [vmem:[%s1 + $0x88] sm:$0xff]
    %v42 = vld [vmem:[%s1 + $0x90] sm:$0xff]
    %v43 = vld [vmem:[%s1 + $0x98] sm:$0xff]
    %v44 = vld [vmem:[%s1 + $0xa0] sm:$0xff]
    %v45 = vld [vmem:[%s1 + $0xa8] sm:$0xff]
    %v46 = vld [vmem:[%s1 + $0xb0] sm:$0xff]
    %v47 = vld [vmem:[%s1 + $0xb8] sm:$0xff]
    %v48 = vld [vmem:[%s1 + $0xc0] sm:$0xff]
    %v49 = vld [vmem:[%s1 + $0xc8] sm:$0xff]
    %v50 = vld [vmem:[%s1 + $0xd0] sm:$0xff]
    %v51 = vld [vmem:[%s1 + $0xd8] sm:$0xff]
    %v52 = vld [vmem:[%s1 + $0xe0] sm:$0xff]
    %v53 = vld [vmem:[%s1 + $0xe8] sm:$0xff]
    %v54 = vld [vmem:[%s1 + $0xf0] sm:$0xff]
    %v55 = vld [vmem:[%s1 + $0xf8] sm:$0xff]
    %v56 = vld [vmem:[%s1 + $0x100] sm:$0xff]
    %v57 = vld [vmem:[%s1 + $0x108] sm:$0xff]
    %v58 = vld [vmem:[%s1 + $0x110] sm:$0xff]
    %v59 = vld [vmem:[%s1 + $0x118] sm:$0xff]
    %v60 = vld [vmem:[%s1 + $0x120] sm:$0xff]
    %v61 = vld [vmem:[%s1 + $0x128] sm:$0xff]
    %v62 = vld [vmem:[%s1 + $0x130] sm:$0xff]
    %v63 = vld [vmem:[%s1 + $0x138] sm:$0xff]
    %v64 = vld [vmem:[%s1 + $0x140] sm:$0xff]
    %v65 = vld [vmem:[%s1 + $0x148] sm:$0xff]
    %v66 = vld [vmem:[%s1 + $0x150] sm:$0xff]
    %v67 = vld [vmem:[%s1 + $0x158] sm:$0xff]
    %v68 = vld [vmem:[%s1 + $0x160] sm:$0xff]
    %v69 = vld [vmem:[%s1 + $0x168] sm:$0xff]
    %v70 = vld [vmem:[%s1 + $0x170] sm:$0xff]
    %v71 = vld [vmem:[%s1 + $0x178] sm:$0xff]
    %v72 = vld [vmem:[%s1 + $0x180] sm:$0xff]
    %v73 = vld [vmem:[%s1 + $0x188] sm:$0xff]
    %v74 = vld [vmem:[%s1 + $0x190] sm:$0xff]
    %v75 = vld [vmem:[%s1 + $0x198] sm:$0xff]
    %v76 = vld [vmem:[%s1 + $0x1a0] sm:$0xff]
    %v77 = vld [vmem:[%s1 + $0x1a8] sm:$0xff]
    %v78 = vld [vmem:[%s1 + $0x1b0] sm:$0xff]
    %v79 = vld [vmem:[%s1 + $0x1b8] sm:$0xff]
    %v80 = vld [vmem:[%s1 + $0x1c0] sm:$0xff]
    %v81 = vld [vmem:[%s1 + $0x1c8] sm:$0xff]
    %v82 = vld [vmem:[%s1 + $0x1d0] sm:$0xff]
    %v83 = vld [vmem:[%s1 + $0x1d8] sm:$0xff]
    %v84 = vld [vmem:[%s1 + $0x1e0] sm:$0xff]
    %v85 = vld [vmem:[%s1 + $0x1e8] sm:$0xff]
    %v86 = vld [vmem:[%s1 + $0x1f0] sm:$0xff]
    %v87 = vld [vmem:[%s1 + $0x1f8] sm:$0xff]
    %v88 = vld [vmem:[%s1 + $0x200] sm:$0xff]
    %v89 = vld [vmem:[%s1 + $0x208] sm:$0xff]
    %v90 = vld [vmem:[%s1 + $0x210] sm:$0xff]
    %v91 = vld [vmem:[%s1 + $0x218] sm:$0xff]
    %v92 = vld [vmem:[%s1 + $0x220] sm:$0xff]
    %v93 = vld [vmem:[%s1 + $0x228] sm:$0xff]
    %v94 = vld [vmem:[%s1 + $0x230] sm:$0xff]
    %v95 = vld [vmem:[%s1 + $0x238] sm:$0xff]
    %v96 = vld [vmem:[%s1 + $0x240] sm:$0xff]
    %v97 = vld [vmem:[%s1 + $0x248] sm:$0xff]
    %v98 = vld [vmem:[%s1 + $0x250] sm:$0xff]
    %v99 = vld [vmem:[%s1 + $0x258] sm:$0xff]
    %v100 = vld [vmem:[%s1 + $0x260] sm:$0xff]
    %v101 = vld [vmem:[%s1 + $0x268] sm:$0xff]
    %v102 = vld [vmem:[%s1 + $0x270] sm:$0xff]
    %v103 = vld [vmem:[%s1 + $0x278] sm:$0xff]
    %v104 = vld [vmem:[%s1 + $0x280] sm:$0xff]
    %v105 = vld [vmem:[%s1 + $0x288] sm:$0xff]
    %v106 = vld [vmem:[%s1 + $0x290] sm:$0xff]
    %v107 = vld [vmem:[%s1 + $0x298] sm:$0xff]
    %v108 = vld [vmem:[%s1 + $0x2a0] sm:$0xff]
    %v109 = vld [vmem:[%s1 + $0x2a8] sm:$0xff]
    %v110 = vld [vmem:[%s1 + $0x2b0] sm:$0xff]
    %v111 = vld [vmem:[%s1 + $0x2b8] sm:$0xff]
    %v112 = vld [vmem:[%s1 + $0x2c0] sm:$0xff]
    %v113 = vld [vmem:[%s1 + $0x2c8] sm:$0xff]
    %v114 = vld [vmem:[%s1 + $0x2d0] sm:$0xff]
    %v115 = vld [vmem:[%s1 + $0x2d8] sm:$0xff]
    %v116 = vld [vmem:[%s1 + $0x2e0] sm:$0xff]
    %v117 = vld [vmem:[%s1 + $0x2e8] sm:$0xff]
    %v118 = vld [vmem:[%s1 + $0x2f0] sm:$0xff]
    %v119 = vld [vmem:[%s1 + $0x2f8] sm:$0xff]
    %v120 = vld [vmem:[%s1 + $0x300] sm:$0xff]
    %v121 = vld [vmem:[%s1 + $0x308] sm:$0xff]
    %v122 = vld [vmem:[%s1 + $0x310] sm:$0xff]
    %v123 = vld [vmem:[%s1 + $0x318] sm:$0xff]
    %v124 = vld [vmem:[%s1 + $0x320] sm:$0xff]
    %v125 = vld [vmem:[%s1 + $0x328] sm:$0xff]
    %v126 = vld [vmem:[%s1 + $0x330] sm:$0xff]
    %v127 = vld [vmem:[%s1 + $0x338] sm:$0xff]
    %v128 = vld [vmem:[%s1 + $0x340] sm:$0xff]
    %v129 = vld [vmem:[%s1 + $0x348] sm:$0xff]
    %v130 = vld [vmem:[%s1 + $0x350] sm:$0xff]
    %v131 = vld [vmem:[%s1 + $0x358] sm:$0xff]
    %v132 = vld [vmem:[%s1 + $0x360] sm:$0xff]
    %v133 = vld [vmem:[%s1 + $0x368] sm:$0xff]
    %v134 = vld [vmem:[%s1 + $0x370] sm:$0xff]
    %v135 = vld [vmem:[%s1 + $0x378] sm:$0xff]
    %v136 = vld [vmem:[%s1 + $0x380] sm:$0xff]
    %v137 = vld [vmem:[%s1 + $0x388] sm:$0xff]
    %v138 = vld [vmem:[%s1 + $0x390] sm:$0xff]
    %v139 = vld [vmem:[%s1 + $0x398] sm:$0xff]
    %v140 = vld [vmem:[%s1 + $0x3a0] sm:$0xff]
    %v141 = vld [vmem:[%s1 + $0x3a8] sm:$0xff]
    %v142 = vld [vmem:[%s1 + $0x3b0] sm:$0xff]
    %v143 = vld [vmem:[%s1 + $0x3b8] sm:$0xff]
    %v144 = vld [vmem:[%s1 + $0x3c0] sm:$0xff]
    %v145 = vld [vmem:[%s1 + $0x3c8] sm:$0xff]
    %v146 = vld [vmem:[%s1 + $0x3d0] sm:$0xff]
    %v147 = vld [vmem:[%s1 + $0x3d8] sm:$0xff]
    %v148 = vld [vmem:[%s1 + $0x3e0] sm:$0xff]
    %v149 = vld [vmem:[%s1 + $0x3e8] sm:$0xff]
    %v150 = vld [vmem:[%s1 + $0x3f0] sm:$0xff]
    %v151 = vld [vmem:[%s1 + $0x3f8] sm:$0xff]
    %v152 = vld [vmem:[%s1 + $0x400] sm:$0xff]
    %v153 = vld [vmem:[%s1 + $0x408] sm:$0xff]
    %v154 = vld [vmem:[%s1 + $0x410] sm:$0xff]
    %v155 = vld [vmem:[%s1 + $0x418] sm:$0xff]
    %v156 = vld [vmem:[%s1 + $0x420] sm:$0xff]
    %v157 = vld [vmem:[%s1 + $0x428] sm:$0xff]
    %v158 = vld [vmem:[%s1 + $0x430] sm:$0xff]
    %v159 = vld [vmem:[%s1 + $0x438] sm:$0xff]
    %v160 = vld [vmem:[%s1 + $0x440] sm:$0xff]
    %v161 = vld [vmem:[%s1 + $0x448] sm:$0xff]
    %v162 = vld [vmem:[%s1 + $0x450] sm:$0xff]
    %v163 = vld [vmem:[%s1 + $0x458] sm:$0xff]
    %v164 = vld [vmem:[%s1 + $0x460] sm:$0xff]
    %v165 = vld [vmem:[%s1 + $0x468] sm:$0xff]
    %v166 = vld [vmem:[%s1 + $0x470] sm:$0xff]
    %v167 = vld [vmem:[%s1 + $0x478] sm:$0xff]
    %v168 = vld [vmem:[%s2] sm:$0x1]
    %v170 = vperm.slane %v168, 0
    %v172 = vand.u32 %v39, 4294901760
    %173 = vmatpush.msra.mxu0 %v172
    %v174 = vand.u32 %v38, 4294901760
    %175 = vmatpush.msra.mxu0 %v174
    %v176 = vand.u32 %v37, 4294901760
    %177 = vmatpush.msra.mxu0 %v176
    %v178 = vand.u32 %v36, 4294901760
    %179 = vmatpush.msra.mxu0 %v178
    %v180 = vand.u32 %v35, 4294901760
    %181 = vmatpush.msra.mxu0 %v180
    %v182 = vand.u32 %v34, 4294901760
    %183 = vmatpush.msra.mxu0 %v182
    %v184 = vand.u32 %v33, 4294901760
    %185 = vmatpush.msra.mxu0 %v184
    %v186 = vand.u32 %v32, 4294901760
    %187 = vmatpush.msra.mxu0 %v186
    %v188 = vand.u32 %v31, 4294901760
    %189 = vmatpush.msra.mxu0 %v188
    %v190 = vand.u32 %v30, 4294901760
    %191 = vmatpush.msra.mxu0 %v190
    %v192 = vand.u32 %v29, 4294901760
    %193 = vmatpush.msra.mxu0 %v192
    %v194 = vand.u32 %v28, 4294901760
    %195 = vmatpush.msra.mxu0 %v194
    %v196 = vand.u32 %v27, 4294901760
    %197 = vmatpush.msra.mxu0 %v196
    %v198 = vand.u32 %v26, 4294901760
    %199 = vmatpush.msra.mxu0 %v198
    %v200 = vand.u32 %v25, 4294901760
    %201 = vmatpush.msra.mxu0 %v200
    %v202 = vand.u32 %v24, 4294901760
    %203 = vmatpush.msra.mxu0 %v202
    %v204 = vand.u32 %v15, 4294901760
    %v205 = vsub.f32 %v15, %v204
    %v206 = vand.u32 %v205, 4294901760
    %v207 = vsub.f32 %v205, %v206
    %v208 = vand.u32 %v207, 4294901760
    %209 = vmatmul.f32.gmra.mxu0 %v208
    %v210 = vpop.f32.mrf.mxu0
    %v211 = vadd.f32 %v170, %v210
    %212 = vdwg.mxu0
    %v213 = vand.u32 %v39, 4294901760
    %v214 = vsub.f32 %v39, %v213
    %v215 = vand.u32 %v214, 4294901760
    %v216 = vsub.f32 %v214, %v215
    %v217 = vand.u32 %v216, 4294901760
    %218 = vmatpush.msra.mxu0 %v217
    %v219 = vand.u32 %v38, 4294901760
    %v220 = vsub.f32 %v38, %v219
    %v221 = vand.u32 %v220, 4294901760
    %v222 = vsub.f32 %v220, %v221
    %v223 = vand.u32 %v222, 4294901760
    %224 = vmatpush.msra.mxu0 %v223
    %v225 = vand.u32 %v37, 4294901760
    %v226 = vsub.f32 %v37, %v225
    %v227 = vand.u32 %v226, 4294901760
    %v228 = vsub.f32 %v226, %v227
    %v229 = vand.u32 %v228, 4294901760
    %230 = vmatpush.msra.mxu0 %v229
    %v231 = vand.u32 %v36, 4294901760
    %v232 = vsub.f32 %v36, %v231
    %v233 = vand.u32 %v232, 4294901760
    %v234 = vsub.f32 %v232, %v233
    %v235 = vand.u32 %v234, 4294901760
    %236 = vmatpush.msra.mxu0 %v235
    %v237 = vand.u32 %v35, 4294901760
    %v238 = vsub.f32 %v35, %v237
    %v239 = vand.u32 %v238, 4294901760
    %v240 = vsub.f32 %v238, %v239
    %v241 = vand.u32 %v240, 4294901760
    %242 = vmatpush.msra.mxu0 %v241
    %v243 = vand.u32 %v34, 4294901760
    %v244 = vsub.f32 %v34, %v243
    %v245 = vand.u32 %v244, 4294901760
    %v246 = vsub.f32 %v244, %v245
    %v247 = vand.u32 %v246, 4294901760
    %248 = vmatpush.msra.mxu0 %v247
    %v249 = vand.u32 %v33, 4294901760
    %v250 = vsub.f32 %v33, %v249
    %v251 = vand.u32 %v250, 4294901760
    %v252 = vsub.f32 %v250, %v251
    %v253 = vand.u32 %v252, 4294901760
    %254 = vmatpush.msra.mxu0 %v253
    %v255 = vand.u32 %v32, 4294901760
    %v256 = vsub.f32 %v32, %v255
    %v257 = vand.u32 %v256, 4294901760
    %v258 = vsub.f32 %v256, %v257
    %v259 = vand.u32 %v258, 4294901760
    %260 = vmatpush.msra.mxu0 %v259
    %v261 = vand.u32 %v31, 4294901760
    %v262 = vsub.f32 %v31, %v261
    %v263 = vand.u32 %v262, 4294901760
    %v264 = vsub.f32 %v262, %v263
    %v265 = vand.u32 %v264, 4294901760
    %266 = vmatpush.msra.mxu0 %v265
    %v267 = vand.u32 %v30, 4294901760
    %v268 = vsub.f32 %v30, %v267
    %v269 = vand.u32 %v268, 4294901760
    %v270 = vsub.f32 %v268, %v269
    %v271 = vand.u32 %v270, 4294901760
    %272 = vmatpush.msra.mxu0 %v271
    %v273 = vand.u32 %v29, 4294901760
    %v274 = vsub.f32 %v29, %v273
    %v275 = vand.u32 %v274, 4294901760
    %v276 = vsub.f32 %v274, %v275
    %v277 = vand.u32 %v276, 4294901760
    %278 = vmatpush.msra.mxu0 %v277
    %v279 = vand.u32 %v28, 4294901760
    %v280 = vsub.f32 %v28, %v279
    %v281 = vand.u32 %v280, 4294901760
    %v282 = vsub.f32 %v280, %v281
    %v283 = vand.u32 %v282, 4294901760
    %284 = vmatpush.msra.mxu0 %v283
    %v285 = vand.u32 %v27, 4294901760
    %v286 = vsub.f32 %v27, %v285
    %v287 = vand.u32 %v286, 4294901760
    %v288 = vsub.f32 %v286, %v287
    %v289 = vand.u32 %v288, 4294901760
    %290 = vmatpush.msra.mxu0 %v289
    %v291 = vand.u32 %v26, 4294901760
    %v292 = vsub.f32 %v26, %v291
    %v293 = vand.u32 %v292, 4294901760
    %v294 = vsub.f32 %v292, %v293
    %v295 = vand.u32 %v294, 4294901760
    %296 = vmatpush.msra.mxu0 %v295
    %v297 = vand.u32 %v25, 4294901760
    %v298 = vsub.f32 %v25, %v297
    %v299 = vand.u32 %v298, 4294901760
    %v300 = vsub.f32 %v298, %v299
    %v301 = vand.u32 %v300, 4294901760
    %302 = vmatpush.msra.mxu0 %v301
    %v303 = vand.u32 %v24, 4294901760
    %v304 = vsub.f32 %v24, %v303
    %v305 = vand.u32 %v304, 4294901760
    %v306 = vsub.f32 %v304, %v305
    %v307 = vand.u32 %v306, 4294901760
    %308 = vmatpush.msra.mxu0 %v307
    %v309 = vand.u32 %v15, 4294901760
    %310 = vmatmul.f32.gmra.mxu0 %v309
    %v311 = vpop.f32.mrf.mxu0
    %v312 = vadd.f32 %v211, %v311
    %313 = vdwg.mxu0
    %v314 = vand.u32 %v39, 4294901760
    %v315 = vsub.f32 %v39, %v314
    %316 = vmatpush.msra.mxu0 %v315
    %v317 = vand.u32 %v38, 4294901760
    %v318 = vsub.f32 %v38, %v317
    %319 = vmatpush.msra.mxu0 %v318
    %v320 = vand.u32 %v37, 4294901760
    %v321 = vsub.f32 %v37, %v320
    %322 = vmatpush.msra.mxu0 %v321
    %v323 = vand.u32 %v36, 4294901760
    %v324 = vsub.f32 %v36, %v323
    %325 = vmatpush.msra.mxu0 %v324
    %v326 = vand.u32 %v35, 4294901760
    %v327 = vsub.f32 %v35, %v326
    %328 = vmatpush.msra.mxu0 %v327
    %v329 = vand.u32 %v34, 4294901760
    %v330 = vsub.f32 %v34, %v329
    %331 = vmatpush.msra.mxu0 %v330
    %v332 = vand.u32 %v33, 4294901760
    %v333 = vsub.f32 %v33, %v332
    %334 = vmatpush.msra.mxu0 %v333
    %v335 = vand.u32 %v32, 4294901760
    %v336 = vsub.f32 %v32, %v335
    %337 = vmatpush.msra.mxu0 %v336
    %v338 = vand.u32 %v31, 4294901760
    %v339 = vsub.f32 %v31, %v338
    %340 = vmatpush.msra.mxu0 %v339
    %v341 = vand.u32 %v30, 4294901760
    %v342 = vsub.f32 %v30, %v341
    %343 = vmatpush.msra.mxu0 %v342
    %v344 = vand.u32 %v29, 4294901760
    %v345 = vsub.f32 %v29, %v344
    %346 = vmatpush.msra.mxu0 %v345
    %v347 = vand.u32 %v28, 4294901760
    %v348 = vsub.f32 %v28, %v347
    %349 = vmatpush.msra.mxu0 %v348
    %v350 = vand.u32 %v27, 4294901760
    %v351 = vsub.f32 %v27, %v350
    %352 = vmatpush.msra.mxu0 %v351
    %v353 = vand.u32 %v26, 4294901760
    %v354 = vsub.f32 %v26, %v353
    %355 = vmatpush.msra.mxu0 %v354
    %v356 = vand.u32 %v25, 4294901760
    %v357 = vsub.f32 %v25, %v356
    %358 = vmatpush.msra.mxu0 %v357
    %v359 = vand.u32 %v24, 4294901760
    %v360 = vsub.f32 %v24, %v359
    %361 = vmatpush.msra.mxu0 %v360
    %v362 = vand.u32 %v15, 4294901760
    %v363 = vsub.f32 %v15, %v362
    %364 = vmatmul.f32.gmra.mxu0 %v363
    %v365 = vpop.f32.mrf.mxu0
    %v366 = vadd.f32 %v312, %v365
    %367 = vdwg.mxu0
    %v368 = vand.u32 %v39, 4294901760
    %369 = vmatpush.msra.mxu0 %v368
    %v370 = vand.u32 %v38, 4294901760
    %371 = vmatpush.msra.mxu0 %v370
    %v372 = vand.u32 %v37, 4294901760
    %373 = vmatpush.msra.mxu0 %v372
    %v374 = vand.u32 %v36, 4294901760
    %375 = vmatpush.msra.mxu0 %v374
    %v376 = vand.u32 %v35, 4294901760
    %377 = vmatpush.msra.mxu0 %v376
    %v378 = vand.u32 %v34, 4294901760
    %379 = vmatpush.msra.mxu0 %v378
    %v380 = vand.u32 %v33, 4294901760
    %381 = vmatpush.msra.mxu0 %v380
    %v382 = vand.u32 %v32, 4294901760
    %383 = vmatpush.msra.mxu0 %v382
    %v384 = vand.u32 %v31, 4294901760
    %385 = vmatpush.msra.mxu0 %v384
    %v386 = vand.u32 %v30, 4294901760
    %387 = vmatpush.msra.mxu0 %v386
    %v388 = vand.u32 %v29, 4294901760
    %389 = vmatpush.msra.mxu0 %v388
    %v390 = vand.u32 %v28, 4294901760
    %391 = vmatpush.msra.mxu0 %v390
    %v392 = vand.u32 %v27, 4294901760
    %393 = vmatpush.msra.mxu0 %v392
    %v394 = vand.u32 %v26, 4294901760
    %395 = vmatpush.msra.mxu0 %v394
    %v396 = vand.u32 %v25, 4294901760
    %397 = vmatpush.msra.mxu0 %v396
    %v398 = vand.u32 %v24, 4294901760
    %399 = vmatpush.msra.mxu0 %v398
    %v400 = vand.u32 %v15, 4294901760
    %v401 = vsub.f32 %v15, %v400
    %v402 = vand.u32 %v401, 4294901760
    %403 = vmatmul.f32.gmra.mxu0 %v402
    %v404 = vpop.f32.mrf.mxu0
    %v405 = vadd.f32 %v366, %v404
    %406 = vdwg.mxu0
    %v407 = vand.u32 %v39, 4294901760
    %v408 = vsub.f32 %v39, %v407
    %v409 = vand.u32 %v408, 4294901760
    %410 = vmatpush.msra.mxu0 %v409
    %v411 = vand.u32 %v38, 4294901760
    %v412 = vsub.f32 %v38, %v411
    %v413 = vand.u32 %v412, 4294901760
    %414 = vmatpush.msra.mxu0 %v413
    %v415 = vand.u32 %v37, 4294901760
    %v416 = vsub.f32 %v37, %v415
    %v417 = vand.u32 %v416, 4294901760
    %418 = vmatpush.msra.mxu0 %v417
    %v419 = vand.u32 %v36, 4294901760
    %v420 = vsub.f32 %v36, %v419
    %v421 = vand.u32 %v420, 4294901760
    %422 = vmatpush.msra.mxu0 %v421
    %v423 = vand.u32 %v35, 4294901760
    %v424 = vsub.f32 %v35, %v423
    %v425 = vand.u32 %v424, 4294901760
    %426 = vmatpush.msra.mxu0 %v425
    %v427 = vand.u32 %v34, 4294901760
    %v428 = vsub.f32 %v34, %v427
    %v429 = vand.u32 %v428, 4294901760
    %430 = vmatpush.msra.mxu0 %v429
    %v431 = vand.u32 %v33, 4294901760
    %v432 = vsub.f32 %v33, %v431
    %v433 = vand.u32 %v432, 4294901760
    %434 = vmatpush.msra.mxu0 %v433
    %v435 = vand.u32 %v32, 4294901760
    %v436 = vsub.f32 %v32, %v435
    %v437 = vand.u32 %v436, 4294901760
    %438 = vmatpush.msra.mxu0 %v437
    %v439 = vand.u32 %v31, 4294901760
    %v440 = vsub.f32 %v31, %v439
    %v441 = vand.u32 %v440, 4294901760
    %442 = vmatpush.msra.mxu0 %v441
    %v443 = vand.u32 %v30, 4294901760
    %v444 = vsub.f32 %v30, %v443
    %v445 = vand.u32 %v444, 4294901760
    %446 = vmatpush.msra.mxu0 %v445
    %v447 = vand.u32 %v29, 4294901760
    %v448 = vsub.f32 %v29, %v447
    %v449 = vand.u32 %v448, 4294901760
    %450 = vmatpush.msra.mxu0 %v449
    %v451 = vand.u32 %v28, 4294901760
    %v452 = vsub.f32 %v28, %v451
    %v453 = vand.u32 %v452, 4294901760
    %454 = vmatpush.msra.mxu0 %v453
    %v455 = vand.u32 %v27, 4294901760
    %v456 = vsub.f32 %v27, %v455
    %v457 = vand.u32 %v456, 4294901760
    %458 = vmatpush.msra.mxu0 %v457
    %v459 = vand.u32 %v26, 4294901760
    %v460 = vsub.f32 %v26, %v459
    %v461 = vand.u32 %v460, 4294901760
    %462 = vmatpush.msra.mxu0 %v461
    %v463 = vand.u32 %v25, 4294901760
    %v464 = vsub.f32 %v25, %v463
    %v465 = vand.u32 %v464, 4294901760
    %466 = vmatpush.msra.mxu0 %v465
    %v467 = vand.u32 %v24, 4294901760
    %v468 = vsub.f32 %v24, %v467
    %v469 = vand.u32 %v468, 4294901760
    %470 = vmatpush.msra.mxu0 %v469
    %v471 = vand.u32 %v15, 4294901760
    %472 = vmatmul.f32.gmra.mxu0 %v471
    %v473 = vpop.f32.mrf.mxu0
    %v474 = vadd.f32 %v405, %v473
    %475 = vdwg.mxu0
    %v476 = vand.u32 %v39, 4294901760
    %477 = vmatpush.msra.mxu0 %v476
    %v478 = vand.u32 %v38, 4294901760
    %479 = vmatpush.msra.mxu0 %v478
    %v480 = vand.u32 %v37, 4294901760
    %481 = vmatpush.msra.mxu0 %v480
    %v482 = vand.u32 %v36, 4294901760
    %483 = vmatpush.msra.mxu0 %v482
    %v484 = vand.u32 %v35, 4294901760
    %485 = vmatpush.msra.mxu0 %v484
    %v486 = vand.u32 %v34, 4294901760
    %487 = vmatpush.msra.mxu0 %v486
    %v488 = vand.u32 %v33, 4294901760
    %489 = vmatpush.msra.mxu0 %v488
    %v490 = vand.u32 %v32, 4294901760
    %491 = vmatpush.msra.mxu0 %v490
    %v492 = vand.u32 %v31, 4294901760
    %493 = vmatpush.msra.mxu0 %v492
    %v494 = vand.u32 %v30, 4294901760
    %495 = vmatpush.msra.mxu0 %v494
    %v496 = vand.u32 %v29, 4294901760
    %497 = vmatpush.msra.mxu0 %v496
    %v498 = vand.u32 %v28, 4294901760
    %499 = vmatpush.msra.mxu0 %v498
    %v500 = vand.u32 %v27, 4294901760
    %501 = vmatpush.msra.mxu0 %v500
    %v502 = vand.u32 %v26, 4294901760
    %503 = vmatpush.msra.mxu0 %v502
    %v504 = vand.u32 %v25, 4294901760
    %505 = vmatpush.msra.mxu0 %v504
    %v506 = vand.u32 %v24, 4294901760
    %507 = vmatpush.msra.mxu0 %v506
    %v508 = vand.u32 %v15, 4294901760
    %509 = vmatmul.f32.gmra.mxu0 %v508
    %v510 = vpop.f32.mrf.mxu0
    %v511 = vadd.f32 %v474, %v510
    %512 = vdwg.mxu0
    %v513 = vand.u32 %v55, 4294901760
    %514 = vmatpush.msra.mxu0 %v513
    %v515 = vand.u32 %v54, 4294901760
    %516 = vmatpush.msra.mxu0 %v515
    %v517 = vand.u32 %v53, 4294901760
    %518 = vmatpush.msra.mxu0 %v517
    %v519 = vand.u32 %v52, 4294901760
    %520 = vmatpush.msra.mxu0 %v519
    %v521 = vand.u32 %v51, 4294901760
    %522 = vmatpush.msra.mxu0 %v521
    %v523 = vand.u32 %v50, 4294901760
    %524 = vmatpush.msra.mxu0 %v523
    %v525 = vand.u32 %v49, 4294901760
    %526 = vmatpush.msra.mxu0 %v525
    %v527 = vand.u32 %v48, 4294901760
    %528 = vmatpush.msra.mxu0 %v527
    %v529 = vand.u32 %v47, 4294901760
    %530 = vmatpush.msra.mxu0 %v529
    %v531 = vand.u32 %v46, 4294901760
    %532 = vmatpush.msra.mxu0 %v531
    %v533 = vand.u32 %v45, 4294901760
    %534 = vmatpush.msra.mxu0 %v533
    %v535 = vand.u32 %v44, 4294901760
    %536 = vmatpush.msra.mxu0 %v535
    %v537 = vand.u32 %v43, 4294901760
    %538 = vmatpush.msra.mxu0 %v537
    %v539 = vand.u32 %v42, 4294901760
    %540 = vmatpush.msra.mxu0 %v539
    %v541 = vand.u32 %v41, 4294901760
    %542 = vmatpush.msra.mxu0 %v541
    %v543 = vand.u32 %v40, 4294901760
    %544 = vmatpush.msra.mxu0 %v543
    %v545 = vand.u32 %v16, 4294901760
    %v546 = vsub.f32 %v16, %v545
    %v547 = vand.u32 %v546, 4294901760
    %v548 = vsub.f32 %v546, %v547
    %v549 = vand.u32 %v548, 4294901760
    %550 = vmatmul.f32.gmra.mxu0 %v549
    %v551 = vpop.f32.mrf.mxu0
    %v552 = vadd.f32 %v511, %v551
    %553 = vdwg.mxu0
    %v554 = vand.u32 %v55, 4294901760
    %v555 = vsub.f32 %v55, %v554
    %v556 = vand.u32 %v555, 4294901760
    %v557 = vsub.f32 %v555, %v556
    %v558 = vand.u32 %v557, 4294901760
    %559 = vmatpush.msra.mxu0 %v558
    %v560 = vand.u32 %v54, 4294901760
    %v561 = vsub.f32 %v54, %v560
    %v562 = vand.u32 %v561, 4294901760
    %v563 = vsub.f32 %v561, %v562
    %v564 = vand.u32 %v563, 4294901760
    %565 = vmatpush.msra.mxu0 %v564
    %v566 = vand.u32 %v53, 4294901760
    %v567 = vsub.f32 %v53, %v566
    %v568 = vand.u32 %v567, 4294901760
    %v569 = vsub.f32 %v567, %v568
    %v570 = vand.u32 %v569, 4294901760
    %571 = vmatpush.msra.mxu0 %v570
    %v572 = vand.u32 %v52, 4294901760
    %v573 = vsub.f32 %v52, %v572
    %v574 = vand.u32 %v573, 4294901760
    %v575 = vsub.f32 %v573, %v574
    %v576 = vand.u32 %v575, 4294901760
    %577 = vmatpush.msra.mxu0 %v576
    %v578 = vand.u32 %v51, 4294901760
    %v579 = vsub.f32 %v51, %v578
    %v580 = vand.u32 %v579, 4294901760
    %v581 = vsub.f32 %v579, %v580
    %v582 = vand.u32 %v581, 4294901760
    %583 = vmatpush.msra.mxu0 %v582
    %v584 = vand.u32 %v50, 4294901760
    %v585 = vsub.f32 %v50, %v584
    %v586 = vand.u32 %v585, 4294901760
    %v587 = vsub.f32 %v585, %v586
    %v588 = vand.u32 %v587, 4294901760
    %589 = vmatpush.msra.mxu0 %v588
    %v590 = vand.u32 %v49, 4294901760
    %v591 = vsub.f32 %v49, %v590
    %v592 = vand.u32 %v591, 4294901760
    %v593 = vsub.f32 %v591, %v592
    %v594 = vand.u32 %v593, 4294901760
    %595 = vmatpush.msra.mxu0 %v594
    %v596 = vand.u32 %v48, 4294901760
    %v597 = vsub.f32 %v48, %v596
    %v598 = vand.u32 %v597, 4294901760
    %v599 = vsub.f32 %v597, %v598
    %v600 = vand.u32 %v599, 4294901760
    %601 = vmatpush.msra.mxu0 %v600
    %v602 = vand.u32 %v47, 4294901760
    %v603 = vsub.f32 %v47, %v602
    %v604 = vand.u32 %v603, 4294901760
    %v605 = vsub.f32 %v603, %v604
    %v606 = vand.u32 %v605, 4294901760
    %607 = vmatpush.msra.mxu0 %v606
    %v608 = vand.u32 %v46, 4294901760
    %v609 = vsub.f32 %v46, %v608
    %v610 = vand.u32 %v609, 4294901760
    %v611 = vsub.f32 %v609, %v610
    %v612 = vand.u32 %v611, 4294901760
    %613 = vmatpush.msra.mxu0 %v612
    %v614 = vand.u32 %v45, 4294901760
    %v615 = vsub.f32 %v45, %v614
    %v616 = vand.u32 %v615, 4294901760
    %v617 = vsub.f32 %v615, %v616
    %v618 = vand.u32 %v617, 4294901760
    %619 = vmatpush.msra.mxu0 %v618
    %v620 = vand.u32 %v44, 4294901760
    %v621 = vsub.f32 %v44, %v620
    %v622 = vand.u32 %v621, 4294901760
    %v623 = vsub.f32 %v621, %v622
    %v624 = vand.u32 %v623, 4294901760
    %625 = vmatpush.msra.mxu0 %v624
    %v626 = vand.u32 %v43, 4294901760
    %v627 = vsub.f32 %v43, %v626
    %v628 = vand.u32 %v627, 4294901760
    %v629 = vsub.f32 %v627, %v628
    %v630 = vand.u32 %v629, 4294901760
    %631 = vmatpush.msra.mxu0 %v630
    %v632 = vand.u32 %v42, 4294901760
    %v633 = vsub.f32 %v42, %v632
    %v634 = vand.u32 %v633, 4294901760
    %v635 = vsub.f32 %v633, %v634
    %v636 = vand.u32 %v635, 4294901760
    %637 = vmatpush.msra.mxu0 %v636
    %v638 = vand.u32 %v41, 4294901760
    %v639 = vsub.f32 %v41, %v638
    %v640 = vand.u32 %v639, 4294901760
    %v641 = vsub.f32 %v639, %v640
    %v642 = vand.u32 %v641, 4294901760
    %643 = vmatpush.msra.mxu0 %v642
    %v644 = vand.u32 %v40, 4294901760
    %v645 = vsub.f32 %v40, %v644
    %v646 = vand.u32 %v645, 4294901760
    %v647 = vsub.f32 %v645, %v646
    %v648 = vand.u32 %v647, 4294901760
    %649 = vmatpush.msra.mxu0 %v648
    %v650 = vand.u32 %v16, 4294901760
    %651 = vmatmul.f32.gmra.mxu0 %v650
    %v652 = vpop.f32.mrf.mxu0
    %v653 = vadd.f32 %v552, %v652
    %654 = vdwg.mxu0
    %v655 = vand.u32 %v55, 4294901760
    %v656 = vsub.f32 %v55, %v655
    %657 = vmatpush.msra.mxu0 %v656
    %v658 = vand.u32 %v54, 4294901760
    %v659 = vsub.f32 %v54, %v658
    %660 = vmatpush.msra.mxu0 %v659
    %v661 = vand.u32 %v53, 4294901760
    %v662 = vsub.f32 %v53, %v661
    %663 = vmatpush.msra.mxu0 %v662
    %v664 = vand.u32 %v52, 4294901760
    %v665 = vsub.f32 %v52, %v664
    %666 = vmatpush.msra.mxu0 %v665
    %v667 = vand.u32 %v51, 4294901760
    %v668 = vsub.f32 %v51, %v667
    %669 = vmatpush.msra.mxu0 %v668
    %v670 = vand.u32 %v50, 4294901760
    %v671 = vsub.f32 %v50, %v670
    %672 = vmatpush.msra.mxu0 %v671
    %v673 = vand.u32 %v49, 4294901760
    %v674 = vsub.f32 %v49, %v673
    %675 = vmatpush.msra.mxu0 %v674
    %v676 = vand.u32 %v48, 4294901760
    %v677 = vsub.f32 %v48, %v676
    %678 = vmatpush.msra.mxu0 %v677
    %v679 = vand.u32 %v47, 4294901760
    %v680 = vsub.f32 %v47, %v679
    %681 = vmatpush.msra.mxu0 %v680
    %v682 = vand.u32 %v46, 4294901760
    %v683 = vsub.f32 %v46, %v682
    %684 = vmatpush.msra.mxu0 %v683
    %v685 = vand.u32 %v45, 4294901760
    %v686 = vsub.f32 %v45, %v685
    %687 = vmatpush.msra.mxu0 %v686
    %v688 = vand.u32 %v44, 4294901760
    %v689 = vsub.f32 %v44, %v688
    %690 = vmatpush.msra.mxu0 %v689
    %v691 = vand.u32 %v43, 4294901760
    %v692 = vsub.f32 %v43, %v691
    %693 = vmatpush.msra.mxu0 %v692
    %v694 = vand.u32 %v42, 4294901760
    %v695 = vsub.f32 %v42, %v694
    %696 = vmatpush.msra.mxu0 %v695
    %v697 = vand.u32 %v41, 4294901760
    %v698 = vsub.f32 %v41, %v697
    %699 = vmatpush.msra.mxu0 %v698
    %v700 = vand.u32 %v40, 4294901760
    %v701 = vsub.f32 %v40, %v700
    %702 = vmatpush.msra.mxu0 %v701
    %v703 = vand.u32 %v16, 4294901760
    %v704 = vsub.f32 %v16, %v703
    %705 = vmatmul.f32.gmra.mxu0 %v704
    %v706 = vpop.f32.mrf.mxu0
    %v707 = vadd.f32 %v653, %v706
    %708 = vdwg.mxu0
    %v709 = vand.u32 %v55, 4294901760
    %710 = vmatpush.msra.mxu0 %v709
    %v711 = vand.u32 %v54, 4294901760
    %712 = vmatpush.msra.mxu0 %v711
    %v713 = vand.u32 %v53, 4294901760
    %714 = vmatpush.msra.mxu0 %v713
    %v715 = vand.u32 %v52, 4294901760
    %716 = vmatpush.msra.mxu0 %v715
    %v717 = vand.u32 %v51, 4294901760
    %718 = vmatpush.msra.mxu0 %v717
    %v719 = vand.u32 %v50, 4294901760
    %720 = vmatpush.msra.mxu0 %v719
    %v721 = vand.u32 %v49, 4294901760
    %722 = vmatpush.msra.mxu0 %v721
    %v723 = vand.u32 %v48, 4294901760
    %724 = vmatpush.msra.mxu0 %v723
    %v725 = vand.u32 %v47, 4294901760
    %726 = vmatpush.msra.mxu0 %v725
    %v727 = vand.u32 %v46, 4294901760
    %728 = vmatpush.msra.mxu0 %v727
    %v729 = vand.u32 %v45, 4294901760
    %730 = vmatpush.msra.mxu0 %v729
    %v731 = vand.u32 %v44, 4294901760
    %732 = vmatpush.msra.mxu0 %v731
    %v733 = vand.u32 %v43, 4294901760
    %734 = vmatpush.msra.mxu0 %v733
    %v735 = vand.u32 %v42, 4294901760
    %736 = vmatpush.msra.mxu0 %v735
    %v737 = vand.u32 %v41, 4294901760
    %738 = vmatpush.msra.mxu0 %v737
    %v739 = vand.u32 %v40, 4294901760
    %740 = vmatpush.msra.mxu0 %v739
    %v741 = vand.u32 %v16, 4294901760
    %v742 = vsub.f32 %v16, %v741
    %v743 = vand.u32 %v742, 4294901760
    %744 = vmatmul.f32.gmra.mxu0 %v743
    %v745 = vpop.f32.mrf.mxu0
    %v746 = vadd.f32 %v707, %v745
    %747 = vdwg.mxu0
    %v748 = vand.u32 %v55, 4294901760
    %v749 = vsub.f32 %v55, %v748
    %v750 = vand.u32 %v749, 4294901760
    %751 = vmatpush.msra.mxu0 %v750
    %v752 = vand.u32 %v54, 4294901760
    %v753 = vsub.f32 %v54, %v752
    %v754 = vand.u32 %v753, 4294901760
    %755 = vmatpush.msra.mxu0 %v754
    %v756 = vand.u32 %v53, 4294901760
    %v757 = vsub.f32 %v53, %v756
    %v758 = vand.u32 %v757, 4294901760
    %759 = vmatpush.msra.mxu0 %v758
    %v760 = vand.u32 %v52, 4294901760
    %v761 = vsub.f32 %v52, %v760
    %v762 = vand.u32 %v761, 4294901760
    %763 = vmatpush.msra.mxu0 %v762
    %v764 = vand.u32 %v51, 4294901760
    %v765 = vsub.f32 %v51, %v764
    %v766 = vand.u32 %v765, 4294901760
    %767 = vmatpush.msra.mxu0 %v766
    %v768 = vand.u32 %v50, 4294901760
    %v769 = vsub.f32 %v50, %v768
    %v770 = vand.u32 %v769, 4294901760
    %771 = vmatpush.msra.mxu0 %v770
    %v772 = vand.u32 %v49, 4294901760
    %v773 = vsub.f32 %v49, %v772
    %v774 = vand.u32 %v773, 4294901760
    %775 = vmatpush.msra.mxu0 %v774
    %v776 = vand.u32 %v48, 4294901760
    %v777 = vsub.f32 %v48, %v776
    %v778 = vand.u32 %v777, 4294901760
    %779 = vmatpush.msra.mxu0 %v778
    %v780 = vand.u32 %v47, 4294901760
    %v781 = vsub.f32 %v47, %v780
    %v782 = vand.u32 %v781, 4294901760
    %783 = vmatpush.msra.mxu0 %v782
    %v784 = vand.u32 %v46, 4294901760
    %v785 = vsub.f32 %v46, %v784
    %v786 = vand.u32 %v785, 4294901760
    %787 = vmatpush.msra.mxu0 %v786
    %v788 = vand.u32 %v45, 4294901760
    %v789 = vsub.f32 %v45, %v788
    %v790 = vand.u32 %v789, 4294901760
    %791 = vmatpush.msra.mxu0 %v790
    %v792 = vand.u32 %v44, 4294901760
    %v793 = vsub.f32 %v44, %v792
    %v794 = vand.u32 %v793, 4294901760
    %795 = vmatpush.msra.mxu0 %v794
    %v796 = vand.u32 %v43, 4294901760
    %v797 = vsub.f32 %v43, %v796
    %v798 = vand.u32 %v797, 4294901760
    %799 = vmatpush.msra.mxu0 %v798
    %v800 = vand.u32 %v42, 4294901760
    %v801 = vsub.f32 %v42, %v800
    %v802 = vand.u32 %v801, 4294901760
    %803 = vmatpush.msra.mxu0 %v802
    %v804 = vand.u32 %v41, 4294901760
    %v805 = vsub.f32 %v41, %v804
    %v806 = vand.u32 %v805, 4294901760
    %807 = vmatpush.msra.mxu0 %v806
    %v808 = vand.u32 %v40, 4294901760
    %v809 = vsub.f32 %v40, %v808
    %v810 = vand.u32 %v809, 4294901760
    %811 = vmatpush.msra.mxu0 %v810
    %v812 = vand.u32 %v16, 4294901760
    %813 = vmatmul.f32.gmra.mxu0 %v812
    %v814 = vpop.f32.mrf.mxu0
    %v815 = vadd.f32 %v746, %v814
    %816 = vdwg.mxu0
    %v817 = vand.u32 %v55, 4294901760
    %818 = vmatpush.msra.mxu0 %v817
    %v819 = vand.u32 %v54, 4294901760
    %820 = vmatpush.msra.mxu0 %v819
    %v821 = vand.u32 %v53, 4294901760
    %822 = vmatpush.msra.mxu0 %v821
    %v823 = vand.u32 %v52, 4294901760
    %824 = vmatpush.msra.mxu0 %v823
    %v825 = vand.u32 %v51, 4294901760
    %826 = vmatpush.msra.mxu0 %v825
    %v827 = vand.u32 %v50, 4294901760
    %828 = vmatpush.msra.mxu0 %v827
    %v829 = vand.u32 %v49, 4294901760
    %830 = vmatpush.msra.mxu0 %v829
    %v831 = vand.u32 %v48, 4294901760
    %832 = vmatpush.msra.mxu0 %v831
    %v833 = vand.u32 %v47, 4294901760
    %834 = vmatpush.msra.mxu0 %v833
    %v835 = vand.u32 %v46, 4294901760
    %836 = vmatpush.msra.mxu0 %v835
    %v837 = vand.u32 %v45, 4294901760
    %838 = vmatpush.msra.mxu0 %v837
    %v839 = vand.u32 %v44, 4294901760
    %840 = vmatpush.msra.mxu0 %v839
    %v841 = vand.u32 %v43, 4294901760
    %842 = vmatpush.msra.mxu0 %v841
    %v843 = vand.u32 %v42, 4294901760
    %844 = vmatpush.msra.mxu0 %v843
    %v845 = vand.u32 %v41, 4294901760
    %846 = vmatpush.msra.mxu0 %v845
    %v847 = vand.u32 %v40, 4294901760
    %848 = vmatpush.msra.mxu0 %v847
    %v849 = vand.u32 %v16, 4294901760
    %850 = vmatmul.f32.gmra.mxu0 %v849
    %v851 = vpop.f32.mrf.mxu0
    %v852 = vadd.f32 %v815, %v851
    %853 = vdwg.mxu0
    %v854 = vand.u32 %v71, 4294901760
    %855 = vmatpush.msra.mxu0 %v854
    %v856 = vand.u32 %v70, 4294901760
    %857 = vmatpush.msra.mxu0 %v856
    %v858 = vand.u32 %v69, 4294901760
    %859 = vmatpush.msra.mxu0 %v858
    %v860 = vand.u32 %v68, 4294901760
    %861 = vmatpush.msra.mxu0 %v860
    %v862 = vand.u32 %v67, 4294901760
    %863 = vmatpush.msra.mxu0 %v862
    %v864 = vand.u32 %v66, 4294901760
    %865 = vmatpush.msra.mxu0 %v864
    %v866 = vand.u32 %v65, 4294901760
    %867 = vmatpush.msra.mxu0 %v866
    %v868 = vand.u32 %v64, 4294901760
    %869 = vmatpush.msra.mxu0 %v868
    %v870 = vand.u32 %v63, 4294901760
    %871 = vmatpush.msra.mxu0 %v870
    %v872 = vand.u32 %v62, 4294901760
    %873 = vmatpush.msra.mxu0 %v872
    %v874 = vand.u32 %v61, 4294901760
    %875 = vmatpush.msra.mxu0 %v874
    %v876 = vand.u32 %v60, 4294901760
    %877 = vmatpush.msra.mxu0 %v876
    %v878 = vand.u32 %v59, 4294901760
    %879 = vmatpush.msra.mxu0 %v878
    %v880 = vand.u32 %v58, 4294901760
    %881 = vmatpush.msra.mxu0 %v880
    %v882 = vand.u32 %v57, 4294901760
    %883 = vmatpush.msra.mxu0 %v882
    %v884 = vand.u32 %v56, 4294901760
    %885 = vmatpush.msra.mxu0 %v884
    %v886 = vand.u32 %v17, 4294901760
    %v887 = vsub.f32 %v17, %v886
    %v888 = vand.u32 %v887, 4294901760
    %v889 = vsub.f32 %v887, %v888
    %v890 = vand.u32 %v889, 4294901760
    %891 = vmatmul.f32.gmra.mxu0 %v890
    %v892 = vpop.f32.mrf.mxu0
    %v893 = vadd.f32 %v852, %v892
    %894 = vdwg.mxu0
    %v895 = vand.u32 %v71, 4294901760
    %v896 = vsub.f32 %v71, %v895
    %v897 = vand.u32 %v896, 4294901760
    %v898 = vsub.f32 %v896, %v897
    %v899 = vand.u32 %v898, 4294901760
    %900 = vmatpush.msra.mxu0 %v899
    %v901 = vand.u32 %v70, 4294901760
    %v902 = vsub.f32 %v70, %v901
    %v903 = vand.u32 %v902, 4294901760
    %v904 = vsub.f32 %v902, %v903
    %v905 = vand.u32 %v904, 4294901760
    %906 = vmatpush.msra.mxu0 %v905
    %v907 = vand.u32 %v69, 4294901760
    %v908 = vsub.f32 %v69, %v907
    %v909 = vand.u32 %v908, 4294901760
    %v910 = vsub.f32 %v908, %v909
    %v911 = vand.u32 %v910, 4294901760
    %912 = vmatpush.msra.mxu0 %v911
    %v913 = vand.u32 %v68, 4294901760
    %v914 = vsub.f32 %v68, %v913
    %v915 = vand.u32 %v914, 4294901760
    %v916 = vsub.f32 %v914, %v915
    %v917 = vand.u32 %v916, 4294901760
    %918 = vmatpush.msra.mxu0 %v917
    %v919 = vand.u32 %v67, 4294901760
    %v920 = vsub.f32 %v67, %v919
    %v921 = vand.u32 %v920, 4294901760
    %v922 = vsub.f32 %v920, %v921
    %v923 = vand.u32 %v922, 4294901760
    %924 = vmatpush.msra.mxu0 %v923
    %v925 = vand.u32 %v66, 4294901760
    %v926 = vsub.f32 %v66, %v925
    %v927 = vand.u32 %v926, 4294901760
    %v928 = vsub.f32 %v926, %v927
    %v929 = vand.u32 %v928, 4294901760
    %930 = vmatpush.msra.mxu0 %v929
    %v931 = vand.u32 %v65, 4294901760
    %v932 = vsub.f32 %v65, %v931
    %v933 = vand.u32 %v932, 4294901760
    %v934 = vsub.f32 %v932, %v933
    %v935 = vand.u32 %v934, 4294901760
    %936 = vmatpush.msra.mxu0 %v935
    %v937 = vand.u32 %v64, 4294901760
    %v938 = vsub.f32 %v64, %v937
    %v939 = vand.u32 %v938, 4294901760
    %v940 = vsub.f32 %v938, %v939
    %v941 = vand.u32 %v940, 4294901760
    %942 = vmatpush.msra.mxu0 %v941
    %v943 = vand.u32 %v63, 4294901760
    %v944 = vsub.f32 %v63, %v943
    %v945 = vand.u32 %v944, 4294901760
    %v946 = vsub.f32 %v944, %v945
    %v947 = vand.u32 %v946, 4294901760
    %948 = vmatpush.msra.mxu0 %v947
    %v949 = vand.u32 %v62, 4294901760
    %v950 = vsub.f32 %v62, %v949
    %v951 = vand.u32 %v950, 4294901760
    %v952 = vsub.f32 %v950, %v951
    %v953 = vand.u32 %v952, 4294901760
    %954 = vmatpush.msra.mxu0 %v953
    %v955 = vand.u32 %v61, 4294901760
    %v956 = vsub.f32 %v61, %v955
    %v957 = vand.u32 %v956, 4294901760
    %v958 = vsub.f32 %v956, %v957
    %v959 = vand.u32 %v958, 4294901760
    %960 = vmatpush.msra.mxu0 %v959
    %v961 = vand.u32 %v60, 4294901760
    %v962 = vsub.f32 %v60, %v961
    %v963 = vand.u32 %v962, 4294901760
    %v964 = vsub.f32 %v962, %v963
    %v965 = vand.u32 %v964, 4294901760
    %966 = vmatpush.msra.mxu0 %v965
    %v967 = vand.u32 %v59, 4294901760
    %v968 = vsub.f32 %v59, %v967
    %v969 = vand.u32 %v968, 4294901760
    %v970 = vsub.f32 %v968, %v969
    %v971 = vand.u32 %v970, 4294901760
    %972 = vmatpush.msra.mxu0 %v971
    %v973 = vand.u32 %v58, 4294901760
    %v974 = vsub.f32 %v58, %v973
    %v975 = vand.u32 %v974, 4294901760
    %v976 = vsub.f32 %v974, %v975
    %v977 = vand.u32 %v976, 4294901760
    %978 = vmatpush.msra.mxu0 %v977
    %v979 = vand.u32 %v57, 4294901760
    %v980 = vsub.f32 %v57, %v979
    %v981 = vand.u32 %v980, 4294901760
    %v982 = vsub.f32 %v980, %v981
    %v983 = vand.u32 %v982, 4294901760
    %984 = vmatpush.msra.mxu0 %v983
    %v985 = vand.u32 %v56, 4294901760
    %v986 = vsub.f32 %v56, %v985
    %v987 = vand.u32 %v986, 4294901760
    %v988 = vsub.f32 %v986, %v987
    %v989 = vand.u32 %v988, 4294901760
    %990 = vmatpush.msra.mxu0 %v989
    %v991 = vand.u32 %v17, 4294901760
    %992 = vmatmul.f32.gmra.mxu0 %v991
    %v993 = vpop.f32.mrf.mxu0
    %v994 = vadd.f32 %v893, %v993
    %995 = vdwg.mxu0
    %v996 = vand.u32 %v71, 4294901760
    %v997 = vsub.f32 %v71, %v996
    %998 = vmatpush.msra.mxu0 %v997
    %v999 = vand.u32 %v70, 4294901760
    %v1000 = vsub.f32 %v70, %v999
    %1001 = vmatpush.msra.mxu0 %v1000
    %v1002 = vand.u32 %v69, 4294901760
    %v1003 = vsub.f32 %v69, %v1002
    %1004 = vmatpush.msra.mxu0 %v1003
    %v1005 = vand.u32 %v68, 4294901760
    %v1006 = vsub.f32 %v68, %v1005
    %1007 = vmatpush.msra.mxu0 %v1006
    %v1008 = vand.u32 %v67, 4294901760
    %v1009 = vsub.f32 %v67, %v1008
    %1010 = vmatpush.msra.mxu0 %v1009
    %v1011 = vand.u32 %v66, 4294901760
    %v1012 = vsub.f32 %v66, %v1011
    %1013 = vmatpush.msra.mxu0 %v1012
    %v1014 = vand.u32 %v65, 4294901760
    %v1015 = vsub.f32 %v65, %v1014
    %1016 = vmatpush.msra.mxu0 %v1015
    %v1017 = vand.u32 %v64, 4294901760
    %v1018 = vsub.f32 %v64, %v1017
    %1019 = vmatpush.msra.mxu0 %v1018
    %v1020 = vand.u32 %v63, 4294901760
    %v1021 = vsub.f32 %v63, %v1020
    %1022 = vmatpush.msra.mxu0 %v1021
    %v1023 = vand.u32 %v62, 4294901760
    %v1024 = vsub.f32 %v62, %v1023
    %1025 = vmatpush.msra.mxu0 %v1024
    %v1026 = vand.u32 %v61, 4294901760
    %v1027 = vsub.f32 %v61, %v1026
    %1028 = vmatpush.msra.mxu0 %v1027
    %v1029 = vand.u32 %v60, 4294901760
    %v1030 = vsub.f32 %v60, %v1029
    %1031 = vmatpush.msra.mxu0 %v1030
    %v1032 = vand.u32 %v59, 4294901760
    %v1033 = vsub.f32 %v59, %v1032
    %1034 = vmatpush.msra.mxu0 %v1033
    %v1035 = vand.u32 %v58, 4294901760
    %v1036 = vsub.f32 %v58, %v1035
    %1037 = vmatpush.msra.mxu0 %v1036
    %v1038 = vand.u32 %v57, 4294901760
    %v1039 = vsub.f32 %v57, %v1038
    %1040 = vmatpush.msra.mxu0 %v1039
    %v1041 = vand.u32 %v56, 4294901760
    %v1042 = vsub.f32 %v56, %v1041
    %1043 = vmatpush.msra.mxu0 %v1042
    %v1044 = vand.u32 %v17, 4294901760
    %v1045 = vsub.f32 %v17, %v1044
    %1046 = vmatmul.f32.gmra.mxu0 %v1045
    %v1047 = vpop.f32.mrf.mxu0
    %v1048 = vadd.f32 %v994, %v1047
    %1049 = vdwg.mxu0
    %v1050 = vand.u32 %v71, 4294901760
    %1051 = vmatpush.msra.mxu0 %v1050
    %v1052 = vand.u32 %v70, 4294901760
    %1053 = vmatpush.msra.mxu0 %v1052
    %v1054 = vand.u32 %v69, 4294901760
    %1055 = vmatpush.msra.mxu0 %v1054
    %v1056 = vand.u32 %v68, 4294901760
    %1057 = vmatpush.msra.mxu0 %v1056
    %v1058 = vand.u32 %v67, 4294901760
    %1059 = vmatpush.msra.mxu0 %v1058
    %v1060 = vand.u32 %v66, 4294901760
    %1061 = vmatpush.msra.mxu0 %v1060
    %v1062 = vand.u32 %v65, 4294901760
    %1063 = vmatpush.msra.mxu0 %v1062
    %v1064 = vand.u32 %v64, 4294901760
    %1065 = vmatpush.msra.mxu0 %v1064
    %v1066 = vand.u32 %v63, 4294901760
    %1067 = vmatpush.msra.mxu0 %v1066
    %v1068 = vand.u32 %v62, 4294901760
    %1069 = vmatpush.msra.mxu0 %v1068
    %v1070 = vand.u32 %v61, 4294901760
    %1071 = vmatpush.msra.mxu0 %v1070
    %v1072 = vand.u32 %v60, 4294901760
    %1073 = vmatpush.msra.mxu0 %v1072
    %v1074 = vand.u32 %v59, 4294901760
    %1075 = vmatpush.msra.mxu0 %v1074
    %v1076 = vand.u32 %v58, 4294901760
    %1077 = vmatpush.msra.mxu0 %v1076
    %v1078 = vand.u32 %v57, 4294901760
    %1079 = vmatpush.msra.mxu0 %v1078
    %v1080 = vand.u32 %v56, 4294901760
    %1081 = vmatpush.msra.mxu0 %v1080
    %v1082 = vand.u32 %v17, 4294901760
    %v1083 = vsub.f32 %v17, %v1082
    %v1084 = vand.u32 %v1083, 4294901760
    %1085 = vmatmul.f32.gmra.mxu0 %v1084
    %v1086 = vpop.f32.mrf.mxu0
    %v1087 = vadd.f32 %v1048, %v1086
    %1088 = vdwg.mxu0
    %v1089 = vand.u32 %v71, 4294901760
    %v1090 = vsub.f32 %v71, %v1089
    %v1091 = vand.u32 %v1090, 4294901760
    %1092 = vmatpush.msra.mxu0 %v1091
    %v1093 = vand.u32 %v70, 4294901760
    %v1094 = vsub.f32 %v70, %v1093
    %v1095 = vand.u32 %v1094, 4294901760
    %1096 = vmatpush.msra.mxu0 %v1095
    %v1097 = vand.u32 %v69, 4294901760
    %v1098 = vsub.f32 %v69, %v1097
    %v1099 = vand.u32 %v1098, 4294901760
    %1100 = vmatpush.msra.mxu0 %v1099
    %v1101 = vand.u32 %v68, 4294901760
    %v1102 = vsub.f32 %v68, %v1101
    %v1103 = vand.u32 %v1102, 4294901760
    %1104 = vmatpush.msra.mxu0 %v1103
    %v1105 = vand.u32 %v67, 4294901760
    %v1106 = vsub.f32 %v67, %v1105
    %v1107 = vand.u32 %v1106, 4294901760
    %1108 = vmatpush.msra.mxu0 %v1107
    %v1109 = vand.u32 %v66, 4294901760
    %v1110 = vsub.f32 %v66, %v1109
    %v1111 = vand.u32 %v1110, 4294901760
    %1112 = vmatpush.msra.mxu0 %v1111
    %v1113 = vand.u32 %v65, 4294901760
    %v1114 = vsub.f32 %v65, %v1113
    %v1115 = vand.u32 %v1114, 4294901760
    %1116 = vmatpush.msra.mxu0 %v1115
    %v1117 = vand.u32 %v64, 4294901760
    %v1118 = vsub.f32 %v64, %v1117
    %v1119 = vand.u32 %v1118, 4294901760
    %1120 = vmatpush.msra.mxu0 %v1119
    %v1121 = vand.u32 %v63, 4294901760
    %v1122 = vsub.f32 %v63, %v1121
    %v1123 = vand.u32 %v1122, 4294901760
    %1124 = vmatpush.msra.mxu0 %v1123
    %v1125 = vand.u32 %v62, 4294901760
    %v1126 = vsub.f32 %v62, %v1125
    %v1127 = vand.u32 %v1126, 4294901760
    %1128 = vmatpush.msra.mxu0 %v1127
    %v1129 = vand.u32 %v61, 4294901760
    %v1130 = vsub.f32 %v61, %v1129
    %v1131 = vand.u32 %v1130, 4294901760
    %1132 = vmatpush.msra.mxu0 %v1131
    %v1133 = vand.u32 %v60, 4294901760
    %v1134 = vsub.f32 %v60, %v1133
    %v1135 = vand.u32 %v1134, 4294901760
    %1136 = vmatpush.msra.mxu0 %v1135
    %v1137 = vand.u32 %v59, 4294901760
    %v1138 = vsub.f32 %v59, %v1137
    %v1139 = vand.u32 %v1138, 4294901760
    %1140 = vmatpush.msra.mxu0 %v1139
    %v1141 = vand.u32 %v58, 4294901760
    %v1142 = vsub.f32 %v58, %v1141
    %v1143 = vand.u32 %v1142, 4294901760
    %1144 = vmatpush.msra.mxu0 %v1143
    %v1145 = vand.u32 %v57, 4294901760
    %v1146 = vsub.f32 %v57, %v1145
    %v1147 = vand.u32 %v1146, 4294901760
    %1148 = vmatpush.msra.mxu0 %v1147
    %v1149 = vand.u32 %v56, 4294901760
    %v1150 = vsub.f32 %v56, %v1149
    %v1151 = vand.u32 %v1150, 4294901760
    %1152 = vmatpush.msra.mxu0 %v1151
    %v1153 = vand.u32 %v17, 4294901760
    %1154 = vmatmul.f32.gmra.mxu0 %v1153
    %v1155 = vpop.f32.mrf.mxu0
    %v1156 = vadd.f32 %v1087, %v1155
    %1157 = vdwg.mxu0
    %v1158 = vand.u32 %v71, 4294901760
    %1159 = vmatpush.msra.mxu0 %v1158
    %v1160 = vand.u32 %v70, 4294901760
    %1161 = vmatpush.msra.mxu0 %v1160
    %v1162 = vand.u32 %v69, 4294901760
    %1163 = vmatpush.msra.mxu0 %v1162
    %v1164 = vand.u32 %v68, 4294901760
    %1165 = vmatpush.msra.mxu0 %v1164
    %v1166 = vand.u32 %v67, 4294901760
    %1167 = vmatpush.msra.mxu0 %v1166
    %v1168 = vand.u32 %v66, 4294901760
    %1169 = vmatpush.msra.mxu0 %v1168
    %v1170 = vand.u32 %v65, 4294901760
    %1171 = vmatpush.msra.mxu0 %v1170
    %v1172 = vand.u32 %v64, 4294901760
    %1173 = vmatpush.msra.mxu0 %v1172
    %v1174 = vand.u32 %v63, 4294901760
    %1175 = vmatpush.msra.mxu0 %v1174
    %v1176 = vand.u32 %v62, 4294901760
    %1177 = vmatpush.msra.mxu0 %v1176
    %v1178 = vand.u32 %v61, 4294901760
    %1179 = vmatpush.msra.mxu0 %v1178
    %v1180 = vand.u32 %v60, 4294901760
    %1181 = vmatpush.msra.mxu0 %v1180
    %v1182 = vand.u32 %v59, 4294901760
    %1183 = vmatpush.msra.mxu0 %v1182
    %v1184 = vand.u32 %v58, 4294901760
    %1185 = vmatpush.msra.mxu0 %v1184
    %v1186 = vand.u32 %v57, 4294901760
    %1187 = vmatpush.msra.mxu0 %v1186
    %v1188 = vand.u32 %v56, 4294901760
    %1189 = vmatpush.msra.mxu0 %v1188
    %v1190 = vand.u32 %v17, 4294901760
    %1191 = vmatmul.f32.gmra.mxu0 %v1190
    %v1192 = vpop.f32.mrf.mxu0
    %v1193 = vadd.f32 %v1156, %v1192
    %1194 = vdwg.mxu0
    %v1195 = vand.u32 %v87, 4294901760
    %1196 = vmatpush.msra.mxu0 %v1195
    %v1197 = vand.u32 %v86, 4294901760
    %1198 = vmatpush.msra.mxu0 %v1197
    %v1199 = vand.u32 %v85, 4294901760
    %1200 = vmatpush.msra.mxu0 %v1199
    %v1201 = vand.u32 %v84, 4294901760
    %1202 = vmatpush.msra.mxu0 %v1201
    %v1203 = vand.u32 %v83, 4294901760
    %1204 = vmatpush.msra.mxu0 %v1203
    %v1205 = vand.u32 %v82, 4294901760
    %1206 = vmatpush.msra.mxu0 %v1205
    %v1207 = vand.u32 %v81, 4294901760
    %1208 = vmatpush.msra.mxu0 %v1207
    %v1209 = vand.u32 %v80, 4294901760
    %1210 = vmatpush.msra.mxu0 %v1209
    %v1211 = vand.u32 %v79, 4294901760
    %1212 = vmatpush.msra.mxu0 %v1211
    %v1213 = vand.u32 %v78, 4294901760
    %1214 = vmatpush.msra.mxu0 %v1213
    %v1215 = vand.u32 %v77, 4294901760
    %1216 = vmatpush.msra.mxu0 %v1215
    %v1217 = vand.u32 %v76, 4294901760
    %1218 = vmatpush.msra.mxu0 %v1217
    %v1219 = vand.u32 %v75, 4294901760
    %1220 = vmatpush.msra.mxu0 %v1219
    %v1221 = vand.u32 %v74, 4294901760
    %1222 = vmatpush.msra.mxu0 %v1221
    %v1223 = vand.u32 %v73, 4294901760
    %1224 = vmatpush.msra.mxu0 %v1223
    %v1225 = vand.u32 %v72, 4294901760
    %1226 = vmatpush.msra.mxu0 %v1225
    %v1227 = vand.u32 %v18, 4294901760
    %v1228 = vsub.f32 %v18, %v1227
    %v1229 = vand.u32 %v1228, 4294901760
    %v1230 = vsub.f32 %v1228, %v1229
    %v1231 = vand.u32 %v1230, 4294901760
    %1232 = vmatmul.f32.gmra.mxu0 %v1231
    %v1233 = vpop.f32.mrf.mxu0
    %v1234 = vadd.f32 %v1193, %v1233
    %1235 = vdwg.mxu0
    %v1236 = vand.u32 %v87, 4294901760
    %v1237 = vsub.f32 %v87, %v1236
    %v1238 = vand.u32 %v1237, 4294901760
    %v1239 = vsub.f32 %v1237, %v1238
    %v1240 = vand.u32 %v1239, 4294901760
    %1241 = vmatpush.msra.mxu0 %v1240
    %v1242 = vand.u32 %v86, 4294901760
    %v1243 = vsub.f32 %v86, %v1242
    %v1244 = vand.u32 %v1243, 4294901760
    %v1245 = vsub.f32 %v1243, %v1244
    %v1246 = vand.u32 %v1245, 4294901760
    %1247 = vmatpush.msra.mxu0 %v1246
    %v1248 = vand.u32 %v85, 4294901760
    %v1249 = vsub.f32 %v85, %v1248
    %v1250 = vand.u32 %v1249, 4294901760
    %v1251 = vsub.f32 %v1249, %v1250
    %v1252 = vand.u32 %v1251, 4294901760
    %1253 = vmatpush.msra.mxu0 %v1252
    %v1254 = vand.u32 %v84, 4294901760
    %v1255 = vsub.f32 %v84, %v1254
    %v1256 = vand.u32 %v1255, 4294901760
    %v1257 = vsub.f32 %v1255, %v1256
    %v1258 = vand.u32 %v1257, 4294901760
    %1259 = vmatpush.msra.mxu0 %v1258
    %v1260 = vand.u32 %v83, 4294901760
    %v1261 = vsub.f32 %v83, %v1260
    %v1262 = vand.u32 %v1261, 4294901760
    %v1263 = vsub.f32 %v1261, %v1262
    %v1264 = vand.u32 %v1263, 4294901760
    %1265 = vmatpush.msra.mxu0 %v1264
    %v1266 = vand.u32 %v82, 4294901760
    %v1267 = vsub.f32 %v82, %v1266
    %v1268 = vand.u32 %v1267, 4294901760
    %v1269 = vsub.f32 %v1267, %v1268
    %v1270 = vand.u32 %v1269, 4294901760
    %1271 = vmatpush.msra.mxu0 %v1270
    %v1272 = vand.u32 %v81, 4294901760
    %v1273 = vsub.f32 %v81, %v1272
    %v1274 = vand.u32 %v1273, 4294901760
    %v1275 = vsub.f32 %v1273, %v1274
    %v1276 = vand.u32 %v1275, 4294901760
    %1277 = vmatpush.msra.mxu0 %v1276
    %v1278 = vand.u32 %v80, 4294901760
    %v1279 = vsub.f32 %v80, %v1278
    %v1280 = vand.u32 %v1279, 4294901760
    %v1281 = vsub.f32 %v1279, %v1280
    %v1282 = vand.u32 %v1281, 4294901760
    %1283 = vmatpush.msra.mxu0 %v1282
    %v1284 = vand.u32 %v79, 4294901760
    %v1285 = vsub.f32 %v79, %v1284
    %v1286 = vand.u32 %v1285, 4294901760
    %v1287 = vsub.f32 %v1285, %v1286
    %v1288 = vand.u32 %v1287, 4294901760
    %1289 = vmatpush.msra.mxu0 %v1288
    %v1290 = vand.u32 %v78, 4294901760
    %v1291 = vsub.f32 %v78, %v1290
    %v1292 = vand.u32 %v1291, 4294901760
    %v1293 = vsub.f32 %v1291, %v1292
    %v1294 = vand.u32 %v1293, 4294901760
    %1295 = vmatpush.msra.mxu0 %v1294
    %v1296 = vand.u32 %v77, 4294901760
    %v1297 = vsub.f32 %v77, %v1296
    %v1298 = vand.u32 %v1297, 4294901760
    %v1299 = vsub.f32 %v1297, %v1298
    %v1300 = vand.u32 %v1299, 4294901760
    %1301 = vmatpush.msra.mxu0 %v1300
    %v1302 = vand.u32 %v76, 4294901760
    %v1303 = vsub.f32 %v76, %v1302
    %v1304 = vand.u32 %v1303, 4294901760
    %v1305 = vsub.f32 %v1303, %v1304
    %v1306 = vand.u32 %v1305, 4294901760
    %1307 = vmatpush.msra.mxu0 %v1306
    %v1308 = vand.u32 %v75, 4294901760
    %v1309 = vsub.f32 %v75, %v1308
    %v1310 = vand.u32 %v1309, 4294901760
    %v1311 = vsub.f32 %v1309, %v1310
    %v1312 = vand.u32 %v1311, 4294901760
    %1313 = vmatpush.msra.mxu0 %v1312
    %v1314 = vand.u32 %v74, 4294901760
    %v1315 = vsub.f32 %v74, %v1314
    %v1316 = vand.u32 %v1315, 4294901760
    %v1317 = vsub.f32 %v1315, %v1316
    %v1318 = vand.u32 %v1317, 4294901760
    %1319 = vmatpush.msra.mxu0 %v1318
    %v1320 = vand.u32 %v73, 4294901760
    %v1321 = vsub.f32 %v73, %v1320
    %v1322 = vand.u32 %v1321, 4294901760
    %v1323 = vsub.f32 %v1321, %v1322
    %v1324 = vand.u32 %v1323, 4294901760
    %1325 = vmatpush.msra.mxu0 %v1324
    %v1326 = vand.u32 %v72, 4294901760
    %v1327 = vsub.f32 %v72, %v1326
    %v1328 = vand.u32 %v1327, 4294901760
    %v1329 = vsub.f32 %v1327, %v1328
    %v1330 = vand.u32 %v1329, 4294901760
    %1331 = vmatpush.msra.mxu0 %v1330
    %v1332 = vand.u32 %v18, 4294901760
    %1333 = vmatmul.f32.gmra.mxu0 %v1332
    %v1334 = vpop.f32.mrf.mxu0
    %v1335 = vadd.f32 %v1234, %v1334
    %1336 = vdwg.mxu0
    %v1337 = vand.u32 %v87, 4294901760
    %v1338 = vsub.f32 %v87, %v1337
    %1339 = vmatpush.msra.mxu0 %v1338
    %v1340 = vand.u32 %v86, 4294901760
    %v1341 = vsub.f32 %v86, %v1340
    %1342 = vmatpush.msra.mxu0 %v1341
    %v1343 = vand.u32 %v85, 4294901760
    %v1344 = vsub.f32 %v85, %v1343
    %1345 = vmatpush.msra.mxu0 %v1344
    %v1346 = vand.u32 %v84, 4294901760
    %v1347 = vsub.f32 %v84, %v1346
    %1348 = vmatpush.msra.mxu0 %v1347
    %v1349 = vand.u32 %v83, 4294901760
    %v1350 = vsub.f32 %v83, %v1349
    %1351 = vmatpush.msra.mxu0 %v1350
    %v1352 = vand.u32 %v82, 4294901760
    %v1353 = vsub.f32 %v82, %v1352
    %1354 = vmatpush.msra.mxu0 %v1353
    %v1355 = vand.u32 %v81, 4294901760
    %v1356 = vsub.f32 %v81, %v1355
    %1357 = vmatpush.msra.mxu0 %v1356
    %v1358 = vand.u32 %v80, 4294901760
    %v1359 = vsub.f32 %v80, %v1358
    %1360 = vmatpush.msra.mxu0 %v1359
    %v1361 = vand.u32 %v79, 4294901760
    %v1362 = vsub.f32 %v79, %v1361
    %1363 = vmatpush.msra.mxu0 %v1362
    %v1364 = vand.u32 %v78, 4294901760
    %v1365 = vsub.f32 %v78, %v1364
    %1366 = vmatpush.msra.mxu0 %v1365
    %v1367 = vand.u32 %v77, 4294901760
    %v1368 = vsub.f32 %v77, %v1367
    %1369 = vmatpush.msra.mxu0 %v1368
    %v1370 = vand.u32 %v76, 4294901760
    %v1371 = vsub.f32 %v76, %v1370
    %1372 = vmatpush.msra.mxu0 %v1371
    %v1373 = vand.u32 %v75, 4294901760
    %v1374 = vsub.f32 %v75, %v1373
    %1375 = vmatpush.msra.mxu0 %v1374
    %v1376 = vand.u32 %v74, 4294901760
    %v1377 = vsub.f32 %v74, %v1376
    %1378 = vmatpush.msra.mxu0 %v1377
    %v1379 = vand.u32 %v73, 4294901760
    %v1380 = vsub.f32 %v73, %v1379
    %1381 = vmatpush.msra.mxu0 %v1380
    %v1382 = vand.u32 %v72, 4294901760
    %v1383 = vsub.f32 %v72, %v1382
    %1384 = vmatpush.msra.mxu0 %v1383
    %v1385 = vand.u32 %v18, 4294901760
    %v1386 = vsub.f32 %v18, %v1385
    %1387 = vmatmul.f32.gmra.mxu0 %v1386
    %v1388 = vpop.f32.mrf.mxu0
    %v1389 = vadd.f32 %v1335, %v1388
    %1390 = vdwg.mxu0
    %v1391 = vand.u32 %v87, 4294901760
    %1392 = vmatpush.msra.mxu0 %v1391
    %v1393 = vand.u32 %v86, 4294901760
    %1394 = vmatpush.msra.mxu0 %v1393
    %v1395 = vand.u32 %v85, 4294901760
    %1396 = vmatpush.msra.mxu0 %v1395
    %v1397 = vand.u32 %v84, 4294901760
    %1398 = vmatpush.msra.mxu0 %v1397
    %v1399 = vand.u32 %v83, 4294901760
    %1400 = vmatpush.msra.mxu0 %v1399
    %v1401 = vand.u32 %v82, 4294901760
    %1402 = vmatpush.msra.mxu0 %v1401
    %v1403 = vand.u32 %v81, 4294901760
    %1404 = vmatpush.msra.mxu0 %v1403
    %v1405 = vand.u32 %v80, 4294901760
    %1406 = vmatpush.msra.mxu0 %v1405
    %v1407 = vand.u32 %v79, 4294901760
    %1408 = vmatpush.msra.mxu0 %v1407
    %v1409 = vand.u32 %v78, 4294901760
    %1410 = vmatpush.msra.mxu0 %v1409
    %v1411 = vand.u32 %v77, 4294901760
    %1412 = vmatpush.msra.mxu0 %v1411
    %v1413 = vand.u32 %v76, 4294901760
    %1414 = vmatpush.msra.mxu0 %v1413
    %v1415 = vand.u32 %v75, 4294901760
    %1416 = vmatpush.msra.mxu0 %v1415
    %v1417 = vand.u32 %v74, 4294901760
    %1418 = vmatpush.msra.mxu0 %v1417
    %v1419 = vand.u32 %v73, 4294901760
    %1420 = vmatpush.msra.mxu0 %v1419
    %v1421 = vand.u32 %v72, 4294901760
    %1422 = vmatpush.msra.mxu0 %v1421
    %v1423 = vand.u32 %v18, 4294901760
    %v1424 = vsub.f32 %v18, %v1423
    %v1425 = vand.u32 %v1424, 4294901760
    %1426 = vmatmul.f32.gmra.mxu0 %v1425
    %v1427 = vpop.f32.mrf.mxu0
    %v1428 = vadd.f32 %v1389, %v1427
    %1429 = vdwg.mxu0
    %v1430 = vand.u32 %v87, 4294901760
    %v1431 = vsub.f32 %v87, %v1430
    %v1432 = vand.u32 %v1431, 4294901760
    %1433 = vmatpush.msra.mxu0 %v1432
    %v1434 = vand.u32 %v86, 4294901760
    %v1435 = vsub.f32 %v86, %v1434
    %v1436 = vand.u32 %v1435, 4294901760
    %1437 = vmatpush.msra.mxu0 %v1436
    %v1438 = vand.u32 %v85, 4294901760
    %v1439 = vsub.f32 %v85, %v1438
    %v1440 = vand.u32 %v1439, 4294901760
    %1441 = vmatpush.msra.mxu0 %v1440
    %v1442 = vand.u32 %v84, 4294901760
    %v1443 = vsub.f32 %v84, %v1442
    %v1444 = vand.u32 %v1443, 4294901760
    %1445 = vmatpush.msra.mxu0 %v1444
    %v1446 = vand.u32 %v83, 4294901760
    %v1447 = vsub.f32 %v83, %v1446
    %v1448 = vand.u32 %v1447, 4294901760
    %1449 = vmatpush.msra.mxu0 %v1448
    %v1450 = vand.u32 %v82, 4294901760
    %v1451 = vsub.f32 %v82, %v1450
    %v1452 = vand.u32 %v1451, 4294901760
    %1453 = vmatpush.msra.mxu0 %v1452
    %v1454 = vand.u32 %v81, 4294901760
    %v1455 = vsub.f32 %v81, %v1454
    %v1456 = vand.u32 %v1455, 4294901760
    %1457 = vmatpush.msra.mxu0 %v1456
    %v1458 = vand.u32 %v80, 4294901760
    %v1459 = vsub.f32 %v80, %v1458
    %v1460 = vand.u32 %v1459, 4294901760
    %1461 = vmatpush.msra.mxu0 %v1460
    %v1462 = vand.u32 %v79, 4294901760
    %v1463 = vsub.f32 %v79, %v1462
    %v1464 = vand.u32 %v1463, 4294901760
    %1465 = vmatpush.msra.mxu0 %v1464
    %v1466 = vand.u32 %v78, 4294901760
    %v1467 = vsub.f32 %v78, %v1466
    %v1468 = vand.u32 %v1467, 4294901760
    %1469 = vmatpush.msra.mxu0 %v1468
    %v1470 = vand.u32 %v77, 4294901760
    %v1471 = vsub.f32 %v77, %v1470
    %v1472 = vand.u32 %v1471, 4294901760
    %1473 = vmatpush.msra.mxu0 %v1472
    %v1474 = vand.u32 %v76, 4294901760
    %v1475 = vsub.f32 %v76, %v1474
    %v1476 = vand.u32 %v1475, 4294901760
    %1477 = vmatpush.msra.mxu0 %v1476
    %v1478 = vand.u32 %v75, 4294901760
    %v1479 = vsub.f32 %v75, %v1478
    %v1480 = vand.u32 %v1479, 4294901760
    %1481 = vmatpush.msra.mxu0 %v1480
    %v1482 = vand.u32 %v74, 4294901760
    %v1483 = vsub.f32 %v74, %v1482
    %v1484 = vand.u32 %v1483, 4294901760
    %1485 = vmatpush.msra.mxu0 %v1484
    %v1486 = vand.u32 %v73, 4294901760
    %v1487 = vsub.f32 %v73, %v1486
    %v1488 = vand.u32 %v1487, 4294901760
    %1489 = vmatpush.msra.mxu0 %v1488
    %v1490 = vand.u32 %v72, 4294901760
    %v1491 = vsub.f32 %v72, %v1490
    %v1492 = vand.u32 %v1491, 4294901760
    %1493 = vmatpush.msra.mxu0 %v1492
    %v1494 = vand.u32 %v18, 4294901760
    %1495 = vmatmul.f32.gmra.mxu0 %v1494
    %v1496 = vpop.f32.mrf.mxu0
    %v1497 = vadd.f32 %v1428, %v1496
    %1498 = vdwg.mxu0
    %v1499 = vand.u32 %v87, 4294901760
    %1500 = vmatpush.msra.mxu0 %v1499
    %v1501 = vand.u32 %v86, 4294901760
    %1502 = vmatpush.msra.mxu0 %v1501
    %v1503 = vand.u32 %v85, 4294901760
    %1504 = vmatpush.msra.mxu0 %v1503
    %v1505 = vand.u32 %v84, 4294901760
    %1506 = vmatpush.msra.mxu0 %v1505
    %v1507 = vand.u32 %v83, 4294901760
    %1508 = vmatpush.msra.mxu0 %v1507
    %v1509 = vand.u32 %v82, 4294901760
    %1510 = vmatpush.msra.mxu0 %v1509
    %v1511 = vand.u32 %v81, 4294901760
    %1512 = vmatpush.msra.mxu0 %v1511
    %v1513 = vand.u32 %v80, 4294901760
    %1514 = vmatpush.msra.mxu0 %v1513
    %v1515 = vand.u32 %v79, 4294901760
    %1516 = vmatpush.msra.mxu0 %v1515
    %v1517 = vand.u32 %v78, 4294901760
    %1518 = vmatpush.msra.mxu0 %v1517
    %v1519 = vand.u32 %v77, 4294901760
    %1520 = vmatpush.msra.mxu0 %v1519
    %v1521 = vand.u32 %v76, 4294901760
    %1522 = vmatpush.msra.mxu0 %v1521
    %v1523 = vand.u32 %v75, 4294901760
    %1524 = vmatpush.msra.mxu0 %v1523
    %v1525 = vand.u32 %v74, 4294901760
    %1526 = vmatpush.msra.mxu0 %v1525
    %v1527 = vand.u32 %v73, 4294901760
    %1528 = vmatpush.msra.mxu0 %v1527
    %v1529 = vand.u32 %v72, 4294901760
    %1530 = vmatpush.msra.mxu0 %v1529
    %v1531 = vand.u32 %v18, 4294901760
    %1532 = vmatmul.f32.gmra.mxu0 %v1531
    %v1533 = vpop.f32.mrf.mxu0
    %v1534 = vadd.f32 %v1497, %v1533
    %1535 = vdwg.mxu0
    %v1536 = vand.u32 %v103, 4294901760
    %1537 = vmatpush.msra.mxu0 %v1536
    %v1538 = vand.u32 %v102, 4294901760
    %1539 = vmatpush.msra.mxu0 %v1538
    %v1540 = vand.u32 %v101, 4294901760
    %1541 = vmatpush.msra.mxu0 %v1540
    %v1542 = vand.u32 %v100, 4294901760
    %1543 = vmatpush.msra.mxu0 %v1542
    %v1544 = vand.u32 %v99, 4294901760
    %1545 = vmatpush.msra.mxu0 %v1544
    %v1546 = vand.u32 %v98, 4294901760
    %1547 = vmatpush.msra.mxu0 %v1546
    %v1548 = vand.u32 %v97, 4294901760
    %1549 = vmatpush.msra.mxu0 %v1548
    %v1550 = vand.u32 %v96, 4294901760
    %1551 = vmatpush.msra.mxu0 %v1550
    %v1552 = vand.u32 %v95, 4294901760
    %1553 = vmatpush.msra.mxu0 %v1552
    %v1554 = vand.u32 %v94, 4294901760
    %1555 = vmatpush.msra.mxu0 %v1554
    %v1556 = vand.u32 %v93, 4294901760
    %1557 = vmatpush.msra.mxu0 %v1556
    %v1558 = vand.u32 %v92, 4294901760
    %1559 = vmatpush.msra.mxu0 %v1558
    %v1560 = vand.u32 %v91, 4294901760
    %1561 = vmatpush.msra.mxu0 %v1560
    %v1562 = vand.u32 %v90, 4294901760
    %1563 = vmatpush.msra.mxu0 %v1562
    %v1564 = vand.u32 %v89, 4294901760
    %1565 = vmatpush.msra.mxu0 %v1564
    %v1566 = vand.u32 %v88, 4294901760
    %1567 = vmatpush.msra.mxu0 %v1566
    %v1568 = vand.u32 %v19, 4294901760
    %v1569 = vsub.f32 %v19, %v1568
    %v1570 = vand.u32 %v1569, 4294901760
    %v1571 = vsub.f32 %v1569, %v1570
    %v1572 = vand.u32 %v1571, 4294901760
    %1573 = vmatmul.f32.gmra.mxu0 %v1572
    %v1574 = vpop.f32.mrf.mxu0
    %v1575 = vadd.f32 %v1534, %v1574
    %1576 = vdwg.mxu0
    %v1577 = vand.u32 %v103, 4294901760
    %v1578 = vsub.f32 %v103, %v1577
    %v1579 = vand.u32 %v1578, 4294901760
    %v1580 = vsub.f32 %v1578, %v1579
    %v1581 = vand.u32 %v1580, 4294901760
    %1582 = vmatpush.msra.mxu0 %v1581
    %v1583 = vand.u32 %v102, 4294901760
    %v1584 = vsub.f32 %v102, %v1583
    %v1585 = vand.u32 %v1584, 4294901760
    %v1586 = vsub.f32 %v1584, %v1585
    %v1587 = vand.u32 %v1586, 4294901760
    %1588 = vmatpush.msra.mxu0 %v1587
    %v1589 = vand.u32 %v101, 4294901760
    %v1590 = vsub.f32 %v101, %v1589
    %v1591 = vand.u32 %v1590, 4294901760
    %v1592 = vsub.f32 %v1590, %v1591
    %v1593 = vand.u32 %v1592, 4294901760
    %1594 = vmatpush.msra.mxu0 %v1593
    %v1595 = vand.u32 %v100, 4294901760
    %v1596 = vsub.f32 %v100, %v1595
    %v1597 = vand.u32 %v1596, 4294901760
    %v1598 = vsub.f32 %v1596, %v1597
    %v1599 = vand.u32 %v1598, 4294901760
    %1600 = vmatpush.msra.mxu0 %v1599
    %v1601 = vand.u32 %v99, 4294901760
    %v1602 = vsub.f32 %v99, %v1601
    %v1603 = vand.u32 %v1602, 4294901760
    %v1604 = vsub.f32 %v1602, %v1603
    %v1605 = vand.u32 %v1604, 4294901760
    %1606 = vmatpush.msra.mxu0 %v1605
    %v1607 = vand.u32 %v98, 4294901760
    %v1608 = vsub.f32 %v98, %v1607
    %v1609 = vand.u32 %v1608, 4294901760
    %v1610 = vsub.f32 %v1608, %v1609
    %v1611 = vand.u32 %v1610, 4294901760
    %1612 = vmatpush.msra.mxu0 %v1611
    %v1613 = vand.u32 %v97, 4294901760
    %v1614 = vsub.f32 %v97, %v1613
    %v1615 = vand.u32 %v1614, 4294901760
    %v1616 = vsub.f32 %v1614, %v1615
    %v1617 = vand.u32 %v1616, 4294901760
    %1618 = vmatpush.msra.mxu0 %v1617
    %v1619 = vand.u32 %v96, 4294901760
    %v1620 = vsub.f32 %v96, %v1619
    %v1621 = vand.u32 %v1620, 4294901760
    %v1622 = vsub.f32 %v1620, %v1621
    %v1623 = vand.u32 %v1622, 4294901760
    %1624 = vmatpush.msra.mxu0 %v1623
    %v1625 = vand.u32 %v95, 4294901760
    %v1626 = vsub.f32 %v95, %v1625
    %v1627 = vand.u32 %v1626, 4294901760
    %v1628 = vsub.f32 %v1626, %v1627
    %v1629 = vand.u32 %v1628, 4294901760
    %1630 = vmatpush.msra.mxu0 %v1629
    %v1631 = vand.u32 %v94, 4294901760
    %v1632 = vsub.f32 %v94, %v1631
    %v1633 = vand.u32 %v1632, 4294901760
    %v1634 = vsub.f32 %v1632, %v1633
    %v1635 = vand.u32 %v1634, 4294901760
    %1636 = vmatpush.msra.mxu0 %v1635
    %v1637 = vand.u32 %v93, 4294901760
    %v1638 = vsub.f32 %v93, %v1637
    %v1639 = vand.u32 %v1638, 4294901760
    %v1640 = vsub.f32 %v1638, %v1639
    %v1641 = vand.u32 %v1640, 4294901760
    %1642 = vmatpush.msra.mxu0 %v1641
    %v1643 = vand.u32 %v92, 4294901760
    %v1644 = vsub.f32 %v92, %v1643
    %v1645 = vand.u32 %v1644, 4294901760
    %v1646 = vsub.f32 %v1644, %v1645
    %v1647 = vand.u32 %v1646, 4294901760
    %1648 = vmatpush.msra.mxu0 %v1647
    %v1649 = vand.u32 %v91, 4294901760
    %v1650 = vsub.f32 %v91, %v1649
    %v1651 = vand.u32 %v1650, 4294901760
    %v1652 = vsub.f32 %v1650, %v1651
    %v1653 = vand.u32 %v1652, 4294901760
    %1654 = vmatpush.msra.mxu0 %v1653
    %v1655 = vand.u32 %v90, 4294901760
    %v1656 = vsub.f32 %v90, %v1655
    %v1657 = vand.u32 %v1656, 4294901760
    %v1658 = vsub.f32 %v1656, %v1657
    %v1659 = vand.u32 %v1658, 4294901760
    %1660 = vmatpush.msra.mxu0 %v1659
    %v1661 = vand.u32 %v89, 4294901760
    %v1662 = vsub.f32 %v89, %v1661
    %v1663 = vand.u32 %v1662, 4294901760
    %v1664 = vsub.f32 %v1662, %v1663
    %v1665 = vand.u32 %v1664, 4294901760
    %1666 = vmatpush.msra.mxu0 %v1665
    %v1667 = vand.u32 %v88, 4294901760
    %v1668 = vsub.f32 %v88, %v1667
    %v1669 = vand.u32 %v1668, 4294901760
    %v1670 = vsub.f32 %v1668, %v1669
    %v1671 = vand.u32 %v1670, 4294901760
    %1672 = vmatpush.msra.mxu0 %v1671
    %v1673 = vand.u32 %v19, 4294901760
    %1674 = vmatmul.f32.gmra.mxu0 %v1673
    %v1675 = vpop.f32.mrf.mxu0
    %v1676 = vadd.f32 %v1575, %v1675
    %1677 = vdwg.mxu0
    %v1678 = vand.u32 %v103, 4294901760
    %v1679 = vsub.f32 %v103, %v1678
    %1680 = vmatpush.msra.mxu0 %v1679
    %v1681 = vand.u32 %v102, 4294901760
    %v1682 = vsub.f32 %v102, %v1681
    %1683 = vmatpush.msra.mxu0 %v1682
    %v1684 = vand.u32 %v101, 4294901760
    %v1685 = vsub.f32 %v101, %v1684
    %1686 = vmatpush.msra.mxu0 %v1685
    %v1687 = vand.u32 %v100, 4294901760
    %v1688 = vsub.f32 %v100, %v1687
    %1689 = vmatpush.msra.mxu0 %v1688
    %v1690 = vand.u32 %v99, 4294901760
    %v1691 = vsub.f32 %v99, %v1690
    %1692 = vmatpush.msra.mxu0 %v1691
    %v1693 = vand.u32 %v98, 4294901760
    %v1694 = vsub.f32 %v98, %v1693
    %1695 = vmatpush.msra.mxu0 %v1694
    %v1696 = vand.u32 %v97, 4294901760
    %v1697 = vsub.f32 %v97, %v1696
    %1698 = vmatpush.msra.mxu0 %v1697
    %v1699 = vand.u32 %v96, 4294901760
    %v1700 = vsub.f32 %v96, %v1699
    %1701 = vmatpush.msra.mxu0 %v1700
    %v1702 = vand.u32 %v95, 4294901760
    %v1703 = vsub.f32 %v95, %v1702
    %1704 = vmatpush.msra.mxu0 %v1703
    %v1705 = vand.u32 %v94, 4294901760
    %v1706 = vsub.f32 %v94, %v1705
    %1707 = vmatpush.msra.mxu0 %v1706
    %v1708 = vand.u32 %v93, 4294901760
    %v1709 = vsub.f32 %v93, %v1708
    %1710 = vmatpush.msra.mxu0 %v1709
    %v1711 = vand.u32 %v92, 4294901760
    %v1712 = vsub.f32 %v92, %v1711
    %1713 = vmatpush.msra.mxu0 %v1712
    %v1714 = vand.u32 %v91, 4294901760
    %v1715 = vsub.f32 %v91, %v1714
    %1716 = vmatpush.msra.mxu0 %v1715
    %v1717 = vand.u32 %v90, 4294901760
    %v1718 = vsub.f32 %v90, %v1717
    %1719 = vmatpush.msra.mxu0 %v1718
    %v1720 = vand.u32 %v89, 4294901760
    %v1721 = vsub.f32 %v89, %v1720
    %1722 = vmatpush.msra.mxu0 %v1721
    %v1723 = vand.u32 %v88, 4294901760
    %v1724 = vsub.f32 %v88, %v1723
    %1725 = vmatpush.msra.mxu0 %v1724
    %v1726 = vand.u32 %v19, 4294901760
    %v1727 = vsub.f32 %v19, %v1726
    %1728 = vmatmul.f32.gmra.mxu0 %v1727
    %v1729 = vpop.f32.mrf.mxu0
    %v1730 = vadd.f32 %v1676, %v1729
    %1731 = vdwg.mxu0
    %v1732 = vand.u32 %v103, 4294901760
    %1733 = vmatpush.msra.mxu0 %v1732
    %v1734 = vand.u32 %v102, 4294901760
    %1735 = vmatpush.msra.mxu0 %v1734
    %v1736 = vand.u32 %v101, 4294901760
    %1737 = vmatpush.msra.mxu0 %v1736
    %v1738 = vand.u32 %v100, 4294901760
    %1739 = vmatpush.msra.mxu0 %v1738
    %v1740 = vand.u32 %v99, 4294901760
    %1741 = vmatpush.msra.mxu0 %v1740
    %v1742 = vand.u32 %v98, 4294901760
    %1743 = vmatpush.msra.mxu0 %v1742
    %v1744 = vand.u32 %v97, 4294901760
    %1745 = vmatpush.msra.mxu0 %v1744
    %v1746 = vand.u32 %v96, 4294901760
    %1747 = vmatpush.msra.mxu0 %v1746
    %v1748 = vand.u32 %v95, 4294901760
    %1749 = vmatpush.msra.mxu0 %v1748
    %v1750 = vand.u32 %v94, 4294901760
    %1751 = vmatpush.msra.mxu0 %v1750
    %v1752 = vand.u32 %v93, 4294901760
    %1753 = vmatpush.msra.mxu0 %v1752
    %v1754 = vand.u32 %v92, 4294901760
    %1755 = vmatpush.msra.mxu0 %v1754
    %v1756 = vand.u32 %v91, 4294901760
    %1757 = vmatpush.msra.mxu0 %v1756
    %v1758 = vand.u32 %v90, 4294901760
    %1759 = vmatpush.msra.mxu0 %v1758
    %v1760 = vand.u32 %v89, 4294901760
    %1761 = vmatpush.msra.mxu0 %v1760
    %v1762 = vand.u32 %v88, 4294901760
    %1763 = vmatpush.msra.mxu0 %v1762
    %v1764 = vand.u32 %v19, 4294901760
    %v1765 = vsub.f32 %v19, %v1764
    %v1766 = vand.u32 %v1765, 4294901760
    %1767 = vmatmul.f32.gmra.mxu0 %v1766
    %v1768 = vpop.f32.mrf.mxu0
    %v1769 = vadd.f32 %v1730, %v1768
    %1770 = vdwg.mxu0
    %v1771 = vand.u32 %v103, 4294901760
    %v1772 = vsub.f32 %v103, %v1771
    %v1773 = vand.u32 %v1772, 4294901760
    %1774 = vmatpush.msra.mxu0 %v1773
    %v1775 = vand.u32 %v102, 4294901760
    %v1776 = vsub.f32 %v102, %v1775
    %v1777 = vand.u32 %v1776, 4294901760
    %1778 = vmatpush.msra.mxu0 %v1777
    %v1779 = vand.u32 %v101, 4294901760
    %v1780 = vsub.f32 %v101, %v1779
    %v1781 = vand.u32 %v1780, 4294901760
    %1782 = vmatpush.msra.mxu0 %v1781
    %v1783 = vand.u32 %v100, 4294901760
    %v1784 = vsub.f32 %v100, %v1783
    %v1785 = vand.u32 %v1784, 4294901760
    %1786 = vmatpush.msra.mxu0 %v1785
    %v1787 = vand.u32 %v99, 4294901760
    %v1788 = vsub.f32 %v99, %v1787
    %v1789 = vand.u32 %v1788, 4294901760
    %1790 = vmatpush.msra.mxu0 %v1789
    %v1791 = vand.u32 %v98, 4294901760
    %v1792 = vsub.f32 %v98, %v1791
    %v1793 = vand.u32 %v1792, 4294901760
    %1794 = vmatpush.msra.mxu0 %v1793
    %v1795 = vand.u32 %v97, 4294901760
    %v1796 = vsub.f32 %v97, %v1795
    %v1797 = vand.u32 %v1796, 4294901760
    %1798 = vmatpush.msra.mxu0 %v1797
    %v1799 = vand.u32 %v96, 4294901760
    %v1800 = vsub.f32 %v96, %v1799
    %v1801 = vand.u32 %v1800, 4294901760
    %1802 = vmatpush.msra.mxu0 %v1801
    %v1803 = vand.u32 %v95, 4294901760
    %v1804 = vsub.f32 %v95, %v1803
    %v1805 = vand.u32 %v1804, 4294901760
    %1806 = vmatpush.msra.mxu0 %v1805
    %v1807 = vand.u32 %v94, 4294901760
    %v1808 = vsub.f32 %v94, %v1807
    %v1809 = vand.u32 %v1808, 4294901760
    %1810 = vmatpush.msra.mxu0 %v1809
    %v1811 = vand.u32 %v93, 4294901760
    %v1812 = vsub.f32 %v93, %v1811
    %v1813 = vand.u32 %v1812, 4294901760
    %1814 = vmatpush.msra.mxu0 %v1813
    %v1815 = vand.u32 %v92, 4294901760
    %v1816 = vsub.f32 %v92, %v1815
    %v1817 = vand.u32 %v1816, 4294901760
    %1818 = vmatpush.msra.mxu0 %v1817
    %v1819 = vand.u32 %v91, 4294901760
    %v1820 = vsub.f32 %v91, %v1819
    %v1821 = vand.u32 %v1820, 4294901760
    %1822 = vmatpush.msra.mxu0 %v1821
    %v1823 = vand.u32 %v90, 4294901760
    %v1824 = vsub.f32 %v90, %v1823
    %v1825 = vand.u32 %v1824, 4294901760
    %1826 = vmatpush.msra.mxu0 %v1825
    %v1827 = vand.u32 %v89, 4294901760
    %v1828 = vsub.f32 %v89, %v1827
    %v1829 = vand.u32 %v1828, 4294901760
    %1830 = vmatpush.msra.mxu0 %v1829
    %v1831 = vand.u32 %v88, 4294901760
    %v1832 = vsub.f32 %v88, %v1831
    %v1833 = vand.u32 %v1832, 4294901760
    %1834 = vmatpush.msra.mxu0 %v1833
    %v1835 = vand.u32 %v19, 4294901760
    %1836 = vmatmul.f32.gmra.mxu0 %v1835
    %v1837 = vpop.f32.mrf.mxu0
    %v1838 = vadd.f32 %v1769, %v1837
    %1839 = vdwg.mxu0
    %v1840 = vand.u32 %v103, 4294901760
    %1841 = vmatpush.msra.mxu0 %v1840
    %v1842 = vand.u32 %v102, 4294901760
    %1843 = vmatpush.msra.mxu0 %v1842
    %v1844 = vand.u32 %v101, 4294901760
    %1845 = vmatpush.msra.mxu0 %v1844
    %v1846 = vand.u32 %v100, 4294901760
    %1847 = vmatpush.msra.mxu0 %v1846
    %v1848 = vand.u32 %v99, 4294901760
    %1849 = vmatpush.msra.mxu0 %v1848
    %v1850 = vand.u32 %v98, 4294901760
    %1851 = vmatpush.msra.mxu0 %v1850
    %v1852 = vand.u32 %v97, 4294901760
    %1853 = vmatpush.msra.mxu0 %v1852
    %v1854 = vand.u32 %v96, 4294901760
    %1855 = vmatpush.msra.mxu0 %v1854
    %v1856 = vand.u32 %v95, 4294901760
    %1857 = vmatpush.msra.mxu0 %v1856
    %v1858 = vand.u32 %v94, 4294901760
    %1859 = vmatpush.msra.mxu0 %v1858
    %v1860 = vand.u32 %v93, 4294901760
    %1861 = vmatpush.msra.mxu0 %v1860
    %v1862 = vand.u32 %v92, 4294901760
    %1863 = vmatpush.msra.mxu0 %v1862
    %v1864 = vand.u32 %v91, 4294901760
    %1865 = vmatpush.msra.mxu0 %v1864
    %v1866 = vand.u32 %v90, 4294901760
    %1867 = vmatpush.msra.mxu0 %v1866
    %v1868 = vand.u32 %v89, 4294901760
    %1869 = vmatpush.msra.mxu0 %v1868
    %v1870 = vand.u32 %v88, 4294901760
    %1871 = vmatpush.msra.mxu0 %v1870
    %v1872 = vand.u32 %v19, 4294901760
    %1873 = vmatmul.f32.gmra.mxu0 %v1872
    %v1874 = vpop.f32.mrf.mxu0
    %v1875 = vadd.f32 %v1838, %v1874
    %1876 = vdwg.mxu0
    %v1877 = vand.u32 %v119, 4294901760
    %1878 = vmatpush.msra.mxu0 %v1877
    %v1879 = vand.u32 %v118, 4294901760
    %1880 = vmatpush.msra.mxu0 %v1879
    %v1881 = vand.u32 %v117, 4294901760
    %1882 = vmatpush.msra.mxu0 %v1881
    %v1883 = vand.u32 %v116, 4294901760
    %1884 = vmatpush.msra.mxu0 %v1883
    %v1885 = vand.u32 %v115, 4294901760
    %1886 = vmatpush.msra.mxu0 %v1885
    %v1887 = vand.u32 %v114, 4294901760
    %1888 = vmatpush.msra.mxu0 %v1887
    %v1889 = vand.u32 %v113, 4294901760
    %1890 = vmatpush.msra.mxu0 %v1889
    %v1891 = vand.u32 %v112, 4294901760
    %1892 = vmatpush.msra.mxu0 %v1891
    %v1893 = vand.u32 %v111, 4294901760
    %1894 = vmatpush.msra.mxu0 %v1893
    %v1895 = vand.u32 %v110, 4294901760
    %1896 = vmatpush.msra.mxu0 %v1895
    %v1897 = vand.u32 %v109, 4294901760
    %1898 = vmatpush.msra.mxu0 %v1897
    %v1899 = vand.u32 %v108, 4294901760
    %1900 = vmatpush.msra.mxu0 %v1899
    %v1901 = vand.u32 %v107, 4294901760
    %1902 = vmatpush.msra.mxu0 %v1901
    %v1903 = vand.u32 %v106, 4294901760
    %1904 = vmatpush.msra.mxu0 %v1903
    %v1905 = vand.u32 %v105, 4294901760
    %1906 = vmatpush.msra.mxu0 %v1905
    %v1907 = vand.u32 %v104, 4294901760
    %1908 = vmatpush.msra.mxu0 %v1907
    %v1909 = vand.u32 %v20, 4294901760
    %v1910 = vsub.f32 %v20, %v1909
    %v1911 = vand.u32 %v1910, 4294901760
    %v1912 = vsub.f32 %v1910, %v1911
    %v1913 = vand.u32 %v1912, 4294901760
    %1914 = vmatmul.f32.gmra.mxu0 %v1913
    %v1915 = vpop.f32.mrf.mxu0
    %v1916 = vadd.f32 %v1875, %v1915
    %1917 = vdwg.mxu0
    %v1918 = vand.u32 %v119, 4294901760
    %v1919 = vsub.f32 %v119, %v1918
    %v1920 = vand.u32 %v1919, 4294901760
    %v1921 = vsub.f32 %v1919, %v1920
    %v1922 = vand.u32 %v1921, 4294901760
    %1923 = vmatpush.msra.mxu0 %v1922
    %v1924 = vand.u32 %v118, 4294901760
    %v1925 = vsub.f32 %v118, %v1924
    %v1926 = vand.u32 %v1925, 4294901760
    %v1927 = vsub.f32 %v1925, %v1926
    %v1928 = vand.u32 %v1927, 4294901760
    %1929 = vmatpush.msra.mxu0 %v1928
    %v1930 = vand.u32 %v117, 4294901760
    %v1931 = vsub.f32 %v117, %v1930
    %v1932 = vand.u32 %v1931, 4294901760
    %v1933 = vsub.f32 %v1931, %v1932
    %v1934 = vand.u32 %v1933, 4294901760
    %1935 = vmatpush.msra.mxu0 %v1934
    %v1936 = vand.u32 %v116, 4294901760
    %v1937 = vsub.f32 %v116, %v1936
    %v1938 = vand.u32 %v1937, 4294901760
    %v1939 = vsub.f32 %v1937, %v1938
    %v1940 = vand.u32 %v1939, 4294901760
    %1941 = vmatpush.msra.mxu0 %v1940
    %v1942 = vand.u32 %v115, 4294901760
    %v1943 = vsub.f32 %v115, %v1942
    %v1944 = vand.u32 %v1943, 4294901760
    %v1945 = vsub.f32 %v1943, %v1944
    %v1946 = vand.u32 %v1945, 4294901760
    %1947 = vmatpush.msra.mxu0 %v1946
    %v1948 = vand.u32 %v114, 4294901760
    %v1949 = vsub.f32 %v114, %v1948
    %v1950 = vand.u32 %v1949, 4294901760
    %v1951 = vsub.f32 %v1949, %v1950
    %v1952 = vand.u32 %v1951, 4294901760
    %1953 = vmatpush.msra.mxu0 %v1952
    %v1954 = vand.u32 %v113, 4294901760
    %v1955 = vsub.f32 %v113, %v1954
    %v1956 = vand.u32 %v1955, 4294901760
    %v1957 = vsub.f32 %v1955, %v1956
    %v1958 = vand.u32 %v1957, 4294901760
    %1959 = vmatpush.msra.mxu0 %v1958
    %v1960 = vand.u32 %v112, 4294901760
    %v1961 = vsub.f32 %v112, %v1960
    %v1962 = vand.u32 %v1961, 4294901760
    %v1963 = vsub.f32 %v1961, %v1962
    %v1964 = vand.u32 %v1963, 4294901760
    %1965 = vmatpush.msra.mxu0 %v1964
    %v1966 = vand.u32 %v111, 4294901760
    %v1967 = vsub.f32 %v111, %v1966
    %v1968 = vand.u32 %v1967, 4294901760
    %v1969 = vsub.f32 %v1967, %v1968
    %v1970 = vand.u32 %v1969, 4294901760
    %1971 = vmatpush.msra.mxu0 %v1970
    %v1972 = vand.u32 %v110, 4294901760
    %v1973 = vsub.f32 %v110, %v1972
    %v1974 = vand.u32 %v1973, 4294901760
    %v1975 = vsub.f32 %v1973, %v1974
    %v1976 = vand.u32 %v1975, 4294901760
    %1977 = vmatpush.msra.mxu0 %v1976
    %v1978 = vand.u32 %v109, 4294901760
    %v1979 = vsub.f32 %v109, %v1978
    %v1980 = vand.u32 %v1979, 4294901760
    %v1981 = vsub.f32 %v1979, %v1980
    %v1982 = vand.u32 %v1981, 4294901760
    %1983 = vmatpush.msra.mxu0 %v1982
    %v1984 = vand.u32 %v108, 4294901760
    %v1985 = vsub.f32 %v108, %v1984
    %v1986 = vand.u32 %v1985, 4294901760
    %v1987 = vsub.f32 %v1985, %v1986
    %v1988 = vand.u32 %v1987, 4294901760
    %1989 = vmatpush.msra.mxu0 %v1988
    %v1990 = vand.u32 %v107, 4294901760
    %v1991 = vsub.f32 %v107, %v1990
    %v1992 = vand.u32 %v1991, 4294901760
    %v1993 = vsub.f32 %v1991, %v1992
    %v1994 = vand.u32 %v1993, 4294901760
    %1995 = vmatpush.msra.mxu0 %v1994
    %v1996 = vand.u32 %v106, 4294901760
    %v1997 = vsub.f32 %v106, %v1996
    %v1998 = vand.u32 %v1997, 4294901760
    %v1999 = vsub.f32 %v1997, %v1998
    %v2000 = vand.u32 %v1999, 4294901760
    %2001 = vmatpush.msra.mxu0 %v2000
    %v2002 = vand.u32 %v105, 4294901760
    %v2003 = vsub.f32 %v105, %v2002
    %v2004 = vand.u32 %v2003, 4294901760
    %v2005 = vsub.f32 %v2003, %v2004
    %v2006 = vand.u32 %v2005, 4294901760
    %2007 = vmatpush.msra.mxu0 %v2006
    %v2008 = vand.u32 %v104, 4294901760
    %v2009 = vsub.f32 %v104, %v2008
    %v2010 = vand.u32 %v2009, 4294901760
    %v2011 = vsub.f32 %v2009, %v2010
    %v2012 = vand.u32 %v2011, 4294901760
    %2013 = vmatpush.msra.mxu0 %v2012
    %v2014 = vand.u32 %v20, 4294901760
    %2015 = vmatmul.f32.gmra.mxu0 %v2014
    %v2016 = vpop.f32.mrf.mxu0
    %v2017 = vadd.f32 %v1916, %v2016
    %2018 = vdwg.mxu0
    %v2019 = vand.u32 %v119, 4294901760
    %v2020 = vsub.f32 %v119, %v2019
    %2021 = vmatpush.msra.mxu0 %v2020
    %v2022 = vand.u32 %v118, 4294901760
    %v2023 = vsub.f32 %v118, %v2022
    %2024 = vmatpush.msra.mxu0 %v2023
    %v2025 = vand.u32 %v117, 4294901760
    %v2026 = vsub.f32 %v117, %v2025
    %2027 = vmatpush.msra.mxu0 %v2026
    %v2028 = vand.u32 %v116, 4294901760
    %v2029 = vsub.f32 %v116, %v2028
    %2030 = vmatpush.msra.mxu0 %v2029
    %v2031 = vand.u32 %v115, 4294901760
    %v2032 = vsub.f32 %v115, %v2031
    %2033 = vmatpush.msra.mxu0 %v2032
    %v2034 = vand.u32 %v114, 4294901760
    %v2035 = vsub.f32 %v114, %v2034
    %2036 = vmatpush.msra.mxu0 %v2035
    %v2037 = vand.u32 %v113, 4294901760
    %v2038 = vsub.f32 %v113, %v2037
    %2039 = vmatpush.msra.mxu0 %v2038
    %v2040 = vand.u32 %v112, 4294901760
    %v2041 = vsub.f32 %v112, %v2040
    %2042 = vmatpush.msra.mxu0 %v2041
    %v2043 = vand.u32 %v111, 4294901760
    %v2044 = vsub.f32 %v111, %v2043
    %2045 = vmatpush.msra.mxu0 %v2044
    %v2046 = vand.u32 %v110, 4294901760
    %v2047 = vsub.f32 %v110, %v2046
    %2048 = vmatpush.msra.mxu0 %v2047
    %v2049 = vand.u32 %v109, 4294901760
    %v2050 = vsub.f32 %v109, %v2049
    %2051 = vmatpush.msra.mxu0 %v2050
    %v2052 = vand.u32 %v108, 4294901760
    %v2053 = vsub.f32 %v108, %v2052
    %2054 = vmatpush.msra.mxu0 %v2053
    %v2055 = vand.u32 %v107, 4294901760
    %v2056 = vsub.f32 %v107, %v2055
    %2057 = vmatpush.msra.mxu0 %v2056
    %v2058 = vand.u32 %v106, 4294901760
    %v2059 = vsub.f32 %v106, %v2058
    %2060 = vmatpush.msra.mxu0 %v2059
    %v2061 = vand.u32 %v105, 4294901760
    %v2062 = vsub.f32 %v105, %v2061
    %2063 = vmatpush.msra.mxu0 %v2062
    %v2064 = vand.u32 %v104, 4294901760
    %v2065 = vsub.f32 %v104, %v2064
    %2066 = vmatpush.msra.mxu0 %v2065
    %v2067 = vand.u32 %v20, 4294901760
    %v2068 = vsub.f32 %v20, %v2067
    %2069 = vmatmul.f32.gmra.mxu0 %v2068
    %v2070 = vpop.f32.mrf.mxu0
    %v2071 = vadd.f32 %v2017, %v2070
    %2072 = vdwg.mxu0
    %v2073 = vand.u32 %v119, 4294901760
    %2074 = vmatpush.msra.mxu0 %v2073
    %v2075 = vand.u32 %v118, 4294901760
    %2076 = vmatpush.msra.mxu0 %v2075
    %v2077 = vand.u32 %v117, 4294901760
    %2078 = vmatpush.msra.mxu0 %v2077
    %v2079 = vand.u32 %v116, 4294901760
    %2080 = vmatpush.msra.mxu0 %v2079
    %v2081 = vand.u32 %v115, 4294901760
    %2082 = vmatpush.msra.mxu0 %v2081
    %v2083 = vand.u32 %v114, 4294901760
    %2084 = vmatpush.msra.mxu0 %v2083
    %v2085 = vand.u32 %v113, 4294901760
    %2086 = vmatpush.msra.mxu0 %v2085
    %v2087 = vand.u32 %v112, 4294901760
    %2088 = vmatpush.msra.mxu0 %v2087
    %v2089 = vand.u32 %v111, 4294901760
    %2090 = vmatpush.msra.mxu0 %v2089
    %v2091 = vand.u32 %v110, 4294901760
    %2092 = vmatpush.msra.mxu0 %v2091
    %v2093 = vand.u32 %v109, 4294901760
    %2094 = vmatpush.msra.mxu0 %v2093
    %v2095 = vand.u32 %v108, 4294901760
    %2096 = vmatpush.msra.mxu0 %v2095
    %v2097 = vand.u32 %v107, 4294901760
    %2098 = vmatpush.msra.mxu0 %v2097
    %v2099 = vand.u32 %v106, 4294901760
    %2100 = vmatpush.msra.mxu0 %v2099
    %v2101 = vand.u32 %v105, 4294901760
    %2102 = vmatpush.msra.mxu0 %v2101
    %v2103 = vand.u32 %v104, 4294901760
    %2104 = vmatpush.msra.mxu0 %v2103
    %v2105 = vand.u32 %v20, 4294901760
    %v2106 = vsub.f32 %v20, %v2105
    %v2107 = vand.u32 %v2106, 4294901760
    %2108 = vmatmul.f32.gmra.mxu0 %v2107
    %v2109 = vpop.f32.mrf.mxu0
    %v2110 = vadd.f32 %v2071, %v2109
    %2111 = vdwg.mxu0
    %v2112 = vand.u32 %v119, 4294901760
    %v2113 = vsub.f32 %v119, %v2112
    %v2114 = vand.u32 %v2113, 4294901760
    %2115 = vmatpush.msra.mxu0 %v2114
    %v2116 = vand.u32 %v118, 4294901760
    %v2117 = vsub.f32 %v118, %v2116
    %v2118 = vand.u32 %v2117, 4294901760
    %2119 = vmatpush.msra.mxu0 %v2118
    %v2120 = vand.u32 %v117, 4294901760
    %v2121 = vsub.f32 %v117, %v2120
    %v2122 = vand.u32 %v2121, 4294901760
    %2123 = vmatpush.msra.mxu0 %v2122
    %v2124 = vand.u32 %v116, 4294901760
    %v2125 = vsub.f32 %v116, %v2124
    %v2126 = vand.u32 %v2125, 4294901760
    %2127 = vmatpush.msra.mxu0 %v2126
    %v2128 = vand.u32 %v115, 4294901760
    %v2129 = vsub.f32 %v115, %v2128
    %v2130 = vand.u32 %v2129, 4294901760
    %2131 = vmatpush.msra.mxu0 %v2130
    %v2132 = vand.u32 %v114, 4294901760
    %v2133 = vsub.f32 %v114, %v2132
    %v2134 = vand.u32 %v2133, 4294901760
    %2135 = vmatpush.msra.mxu0 %v2134
    %v2136 = vand.u32 %v113, 4294901760
    %v2137 = vsub.f32 %v113, %v2136
    %v2138 = vand.u32 %v2137, 4294901760
    %2139 = vmatpush.msra.mxu0 %v2138
    %v2140 = vand.u32 %v112, 4294901760
    %v2141 = vsub.f32 %v112, %v2140
    %v2142 = vand.u32 %v2141, 4294901760
    %2143 = vmatpush.msra.mxu0 %v2142
    %v2144 = vand.u32 %v111, 4294901760
    %v2145 = vsub.f32 %v111, %v2144
    %v2146 = vand.u32 %v2145, 4294901760
    %2147 = vmatpush.msra.mxu0 %v2146
    %v2148 = vand.u32 %v110, 4294901760
    %v2149 = vsub.f32 %v110, %v2148
    %v2150 = vand.u32 %v2149, 4294901760
    %2151 = vmatpush.msra.mxu0 %v2150
    %v2152 = vand.u32 %v109, 4294901760
    %v2153 = vsub.f32 %v109, %v2152
    %v2154 = vand.u32 %v2153, 4294901760
    %2155 = vmatpush.msra.mxu0 %v2154
    %v2156 = vand.u32 %v108, 4294901760
    %v2157 = vsub.f32 %v108, %v2156
    %v2158 = vand.u32 %v2157, 4294901760
    %2159 = vmatpush.msra.mxu0 %v2158
    %v2160 = vand.u32 %v107, 4294901760
    %v2161 = vsub.f32 %v107, %v2160
    %v2162 = vand.u32 %v2161, 4294901760
    %2163 = vmatpush.msra.mxu0 %v2162
    %v2164 = vand.u32 %v106, 4294901760
    %v2165 = vsub.f32 %v106, %v2164
    %v2166 = vand.u32 %v2165, 4294901760
    %2167 = vmatpush.msra.mxu0 %v2166
    %v2168 = vand.u32 %v105, 4294901760
    %v2169 = vsub.f32 %v105, %v2168
    %v2170 = vand.u32 %v2169, 4294901760
    %2171 = vmatpush.msra.mxu0 %v2170
    %v2172 = vand.u32 %v104, 4294901760
    %v2173 = vsub.f32 %v104, %v2172
    %v2174 = vand.u32 %v2173, 4294901760
    %2175 = vmatpush.msra.mxu0 %v2174
    %v2176 = vand.u32 %v20, 4294901760
    %2177 = vmatmul.f32.gmra.mxu0 %v2176
    %v2178 = vpop.f32.mrf.mxu0
    %v2179 = vadd.f32 %v2110, %v2178
    %2180 = vdwg.mxu0
    %v2181 = vand.u32 %v119, 4294901760
    %2182 = vmatpush.msra.mxu0 %v2181
    %v2183 = vand.u32 %v118, 4294901760
    %2184 = vmatpush.msra.mxu0 %v2183
    %v2185 = vand.u32 %v117, 4294901760
    %2186 = vmatpush.msra.mxu0 %v2185
    %v2187 = vand.u32 %v116, 4294901760
    %2188 = vmatpush.msra.mxu0 %v2187
    %v2189 = vand.u32 %v115, 4294901760
    %2190 = vmatpush.msra.mxu0 %v2189
    %v2191 = vand.u32 %v114, 4294901760
    %2192 = vmatpush.msra.mxu0 %v2191
    %v2193 = vand.u32 %v113, 4294901760
    %2194 = vmatpush.msra.mxu0 %v2193
    %v2195 = vand.u32 %v112, 4294901760
    %2196 = vmatpush.msra.mxu0 %v2195
    %v2197 = vand.u32 %v111, 4294901760
    %2198 = vmatpush.msra.mxu0 %v2197
    %v2199 = vand.u32 %v110, 4294901760
    %2200 = vmatpush.msra.mxu0 %v2199
    %v2201 = vand.u32 %v109, 4294901760
    %2202 = vmatpush.msra.mxu0 %v2201
    %v2203 = vand.u32 %v108, 4294901760
    %2204 = vmatpush.msra.mxu0 %v2203
    %v2205 = vand.u32 %v107, 4294901760
    %2206 = vmatpush.msra.mxu0 %v2205
    %v2207 = vand.u32 %v106, 4294901760
    %2208 = vmatpush.msra.mxu0 %v2207
    %v2209 = vand.u32 %v105, 4294901760
    %2210 = vmatpush.msra.mxu0 %v2209
    %v2211 = vand.u32 %v104, 4294901760
    %2212 = vmatpush.msra.mxu0 %v2211
    %v2213 = vand.u32 %v20, 4294901760
    %2214 = vmatmul.f32.gmra.mxu0 %v2213
    %v2215 = vpop.f32.mrf.mxu0
    %v2216 = vadd.f32 %v2179, %v2215
    %2217 = vdwg.mxu0
    %v2218 = vand.u32 %v135, 4294901760
    %2219 = vmatpush.msra.mxu0 %v2218
    %v2220 = vand.u32 %v134, 4294901760
    %2221 = vmatpush.msra.mxu0 %v2220
    %v2222 = vand.u32 %v133, 4294901760
    %2223 = vmatpush.msra.mxu0 %v2222
    %v2224 = vand.u32 %v132, 4294901760
    %2225 = vmatpush.msra.mxu0 %v2224
    %v2226 = vand.u32 %v131, 4294901760
    %2227 = vmatpush.msra.mxu0 %v2226
    %v2228 = vand.u32 %v130, 4294901760
    %2229 = vmatpush.msra.mxu0 %v2228
    %v2230 = vand.u32 %v129, 4294901760
    %2231 = vmatpush.msra.mxu0 %v2230
    %v2232 = vand.u32 %v128, 4294901760
    %2233 = vmatpush.msra.mxu0 %v2232
    %v2234 = vand.u32 %v127, 4294901760
    %2235 = vmatpush.msra.mxu0 %v2234
    %v2236 = vand.u32 %v126, 4294901760
    %2237 = vmatpush.msra.mxu0 %v2236
    %v2238 = vand.u32 %v125, 4294901760
    %2239 = vmatpush.msra.mxu0 %v2238
    %v2240 = vand.u32 %v124, 4294901760
    %2241 = vmatpush.msra.mxu0 %v2240
    %v2242 = vand.u32 %v123, 4294901760
    %2243 = vmatpush.msra.mxu0 %v2242
    %v2244 = vand.u32 %v122, 4294901760
    %2245 = vmatpush.msra.mxu0 %v2244
    %v2246 = vand.u32 %v121, 4294901760
    %2247 = vmatpush.msra.mxu0 %v2246
    %v2248 = vand.u32 %v120, 4294901760
    %2249 = vmatpush.msra.mxu0 %v2248
    %v2250 = vand.u32 %v21, 4294901760
    %v2251 = vsub.f32 %v21, %v2250
    %v2252 = vand.u32 %v2251, 4294901760
    %v2253 = vsub.f32 %v2251, %v2252
    %v2254 = vand.u32 %v2253, 4294901760
    %2255 = vmatmul.f32.gmra.mxu0 %v2254
    %v2256 = vpop.f32.mrf.mxu0
    %v2257 = vadd.f32 %v2216, %v2256
    %2258 = vdwg.mxu0
    %v2259 = vand.u32 %v135, 4294901760
    %v2260 = vsub.f32 %v135, %v2259
    %v2261 = vand.u32 %v2260, 4294901760
    %v2262 = vsub.f32 %v2260, %v2261
    %v2263 = vand.u32 %v2262, 4294901760
    %2264 = vmatpush.msra.mxu0 %v2263
    %v2265 = vand.u32 %v134, 4294901760
    %v2266 = vsub.f32 %v134, %v2265
    %v2267 = vand.u32 %v2266, 4294901760
    %v2268 = vsub.f32 %v2266, %v2267
    %v2269 = vand.u32 %v2268, 4294901760
    %2270 = vmatpush.msra.mxu0 %v2269
    %v2271 = vand.u32 %v133, 4294901760
    %v2272 = vsub.f32 %v133, %v2271
    %v2273 = vand.u32 %v2272, 4294901760
    %v2274 = vsub.f32 %v2272, %v2273
    %v2275 = vand.u32 %v2274, 4294901760
    %2276 = vmatpush.msra.mxu0 %v2275
    %v2277 = vand.u32 %v132, 4294901760
    %v2278 = vsub.f32 %v132, %v2277
    %v2279 = vand.u32 %v2278, 4294901760
    %v2280 = vsub.f32 %v2278, %v2279
    %v2281 = vand.u32 %v2280, 4294901760
    %2282 = vmatpush.msra.mxu0 %v2281
    %v2283 = vand.u32 %v131, 4294901760
    %v2284 = vsub.f32 %v131, %v2283
    %v2285 = vand.u32 %v2284, 4294901760
    %v2286 = vsub.f32 %v2284, %v2285
    %v2287 = vand.u32 %v2286, 4294901760
    %2288 = vmatpush.msra.mxu0 %v2287
    %v2289 = vand.u32 %v130, 4294901760
    %v2290 = vsub.f32 %v130, %v2289
    %v2291 = vand.u32 %v2290, 4294901760
    %v2292 = vsub.f32 %v2290, %v2291
    %v2293 = vand.u32 %v2292, 4294901760
    %2294 = vmatpush.msra.mxu0 %v2293
    %v2295 = vand.u32 %v129, 4294901760
    %v2296 = vsub.f32 %v129, %v2295
    %v2297 = vand.u32 %v2296, 4294901760
    %v2298 = vsub.f32 %v2296, %v2297
    %v2299 = vand.u32 %v2298, 4294901760
    %2300 = vmatpush.msra.mxu0 %v2299
    %v2301 = vand.u32 %v128, 4294901760
    %v2302 = vsub.f32 %v128, %v2301
    %v2303 = vand.u32 %v2302, 4294901760
    %v2304 = vsub.f32 %v2302, %v2303
    %v2305 = vand.u32 %v2304, 4294901760
    %2306 = vmatpush.msra.mxu0 %v2305
    %v2307 = vand.u32 %v127, 4294901760
    %v2308 = vsub.f32 %v127, %v2307
    %v2309 = vand.u32 %v2308, 4294901760
    %v2310 = vsub.f32 %v2308, %v2309
    %v2311 = vand.u32 %v2310, 4294901760
    %2312 = vmatpush.msra.mxu0 %v2311
    %v2313 = vand.u32 %v126, 4294901760
    %v2314 = vsub.f32 %v126, %v2313
    %v2315 = vand.u32 %v2314, 4294901760
    %v2316 = vsub.f32 %v2314, %v2315
    %v2317 = vand.u32 %v2316, 4294901760
    %2318 = vmatpush.msra.mxu0 %v2317
    %v2319 = vand.u32 %v125, 4294901760
    %v2320 = vsub.f32 %v125, %v2319
    %v2321 = vand.u32 %v2320, 4294901760
    %v2322 = vsub.f32 %v2320, %v2321
    %v2323 = vand.u32 %v2322, 4294901760
    %2324 = vmatpush.msra.mxu0 %v2323
    %v2325 = vand.u32 %v124, 4294901760
    %v2326 = vsub.f32 %v124, %v2325
    %v2327 = vand.u32 %v2326, 4294901760
    %v2328 = vsub.f32 %v2326, %v2327
    %v2329 = vand.u32 %v2328, 4294901760
    %2330 = vmatpush.msra.mxu0 %v2329
    %v2331 = vand.u32 %v123, 4294901760
    %v2332 = vsub.f32 %v123, %v2331
    %v2333 = vand.u32 %v2332, 4294901760
    %v2334 = vsub.f32 %v2332, %v2333
    %v2335 = vand.u32 %v2334, 4294901760
    %2336 = vmatpush.msra.mxu0 %v2335
    %v2337 = vand.u32 %v122, 4294901760
    %v2338 = vsub.f32 %v122, %v2337
    %v2339 = vand.u32 %v2338, 4294901760
    %v2340 = vsub.f32 %v2338, %v2339
    %v2341 = vand.u32 %v2340, 4294901760
    %2342 = vmatpush.msra.mxu0 %v2341
    %v2343 = vand.u32 %v121, 4294901760
    %v2344 = vsub.f32 %v121, %v2343
    %v2345 = vand.u32 %v2344, 4294901760
    %v2346 = vsub.f32 %v2344, %v2345
    %v2347 = vand.u32 %v2346, 4294901760
    %2348 = vmatpush.msra.mxu0 %v2347
    %v2349 = vand.u32 %v120, 4294901760
    %v2350 = vsub.f32 %v120, %v2349
    %v2351 = vand.u32 %v2350, 4294901760
    %v2352 = vsub.f32 %v2350, %v2351
    %v2353 = vand.u32 %v2352, 4294901760
    %2354 = vmatpush.msra.mxu0 %v2353
    %v2355 = vand.u32 %v21, 4294901760
    %2356 = vmatmul.f32.gmra.mxu0 %v2355
    %v2357 = vpop.f32.mrf.mxu0
    %v2358 = vadd.f32 %v2257, %v2357
    %2359 = vdwg.mxu0
    %v2360 = vand.u32 %v135, 4294901760
    %v2361 = vsub.f32 %v135, %v2360
    %2362 = vmatpush.msra.mxu0 %v2361
    %v2363 = vand.u32 %v134, 4294901760
    %v2364 = vsub.f32 %v134, %v2363
    %2365 = vmatpush.msra.mxu0 %v2364
    %v2366 = vand.u32 %v133, 4294901760
    %v2367 = vsub.f32 %v133, %v2366
    %2368 = vmatpush.msra.mxu0 %v2367
    %v2369 = vand.u32 %v132, 4294901760
    %v2370 = vsub.f32 %v132, %v2369
    %2371 = vmatpush.msra.mxu0 %v2370
    %v2372 = vand.u32 %v131, 4294901760
    %v2373 = vsub.f32 %v131, %v2372
    %2374 = vmatpush.msra.mxu0 %v2373
    %v2375 = vand.u32 %v130, 4294901760
    %v2376 = vsub.f32 %v130, %v2375
    %2377 = vmatpush.msra.mxu0 %v2376
    %v2378 = vand.u32 %v129, 4294901760
    %v2379 = vsub.f32 %v129, %v2378
    %2380 = vmatpush.msra.mxu0 %v2379
    %v2381 = vand.u32 %v128, 4294901760
    %v2382 = vsub.f32 %v128, %v2381
    %2383 = vmatpush.msra.mxu0 %v2382
    %v2384 = vand.u32 %v127, 4294901760
    %v2385 = vsub.f32 %v127, %v2384
    %2386 = vmatpush.msra.mxu0 %v2385
    %v2387 = vand.u32 %v126, 4294901760
    %v2388 = vsub.f32 %v126, %v2387
    %2389 = vmatpush.msra.mxu0 %v2388
    %v2390 = vand.u32 %v125, 4294901760
    %v2391 = vsub.f32 %v125, %v2390
    %2392 = vmatpush.msra.mxu0 %v2391
    %v2393 = vand.u32 %v124, 4294901760
    %v2394 = vsub.f32 %v124, %v2393
    %2395 = vmatpush.msra.mxu0 %v2394
    %v2396 = vand.u32 %v123, 4294901760
    %v2397 = vsub.f32 %v123, %v2396
    %2398 = vmatpush.msra.mxu0 %v2397
    %v2399 = vand.u32 %v122, 4294901760
    %v2400 = vsub.f32 %v122, %v2399
    %2401 = vmatpush.msra.mxu0 %v2400
    %v2402 = vand.u32 %v121, 4294901760
    %v2403 = vsub.f32 %v121, %v2402
    %2404 = vmatpush.msra.mxu0 %v2403
    %v2405 = vand.u32 %v120, 4294901760
    %v2406 = vsub.f32 %v120, %v2405
    %2407 = vmatpush.msra.mxu0 %v2406
    %v2408 = vand.u32 %v21, 4294901760
    %v2409 = vsub.f32 %v21, %v2408
    %2410 = vmatmul.f32.gmra.mxu0 %v2409
    %v2411 = vpop.f32.mrf.mxu0
    %v2412 = vadd.f32 %v2358, %v2411
    %2413 = vdwg.mxu0
    %v2414 = vand.u32 %v135, 4294901760
    %2415 = vmatpush.msra.mxu0 %v2414
    %v2416 = vand.u32 %v134, 4294901760
    %2417 = vmatpush.msra.mxu0 %v2416
    %v2418 = vand.u32 %v133, 4294901760
    %2419 = vmatpush.msra.mxu0 %v2418
    %v2420 = vand.u32 %v132, 4294901760
    %2421 = vmatpush.msra.mxu0 %v2420
    %v2422 = vand.u32 %v131, 4294901760
    %2423 = vmatpush.msra.mxu0 %v2422
    %v2424 = vand.u32 %v130, 4294901760
    %2425 = vmatpush.msra.mxu0 %v2424
    %v2426 = vand.u32 %v129, 4294901760
    %2427 = vmatpush.msra.mxu0 %v2426
    %v2428 = vand.u32 %v128, 4294901760
    %2429 = vmatpush.msra.mxu0 %v2428
    %v2430 = vand.u32 %v127, 4294901760
    %2431 = vmatpush.msra.mxu0 %v2430
    %v2432 = vand.u32 %v126, 4294901760
    %2433 = vmatpush.msra.mxu0 %v2432
    %v2434 = vand.u32 %v125, 4294901760
    %2435 = vmatpush.msra.mxu0 %v2434
    %v2436 = vand.u32 %v124, 4294901760
    %2437 = vmatpush.msra.mxu0 %v2436
    %v2438 = vand.u32 %v123, 4294901760
    %2439 = vmatpush.msra.mxu0 %v2438
    %v2440 = vand.u32 %v122, 4294901760
    %2441 = vmatpush.msra.mxu0 %v2440
    %v2442 = vand.u32 %v121, 4294901760
    %2443 = vmatpush.msra.mxu0 %v2442
    %v2444 = vand.u32 %v120, 4294901760
    %2445 = vmatpush.msra.mxu0 %v2444
    %v2446 = vand.u32 %v21, 4294901760
    %v2447 = vsub.f32 %v21, %v2446
    %v2448 = vand.u32 %v2447, 4294901760
    %2449 = vmatmul.f32.gmra.mxu0 %v2448
    %v2450 = vpop.f32.mrf.mxu0
    %v2451 = vadd.f32 %v2412, %v2450
    %2452 = vdwg.mxu0
    %v2453 = vand.u32 %v135, 4294901760
    %v2454 = vsub.f32 %v135, %v2453
    %v2455 = vand.u32 %v2454, 4294901760
    %2456 = vmatpush.msra.mxu0 %v2455
    %v2457 = vand.u32 %v134, 4294901760
    %v2458 = vsub.f32 %v134, %v2457
    %v2459 = vand.u32 %v2458, 4294901760
    %2460 = vmatpush.msra.mxu0 %v2459
    %v2461 = vand.u32 %v133, 4294901760
    %v2462 = vsub.f32 %v133, %v2461
    %v2463 = vand.u32 %v2462, 4294901760
    %2464 = vmatpush.msra.mxu0 %v2463
    %v2465 = vand.u32 %v132, 4294901760
    %v2466 = vsub.f32 %v132, %v2465
    %v2467 = vand.u32 %v2466, 4294901760
    %2468 = vmatpush.msra.mxu0 %v2467
    %v2469 = vand.u32 %v131, 4294901760
    %v2470 = vsub.f32 %v131, %v2469
    %v2471 = vand.u32 %v2470, 4294901760
    %2472 = vmatpush.msra.mxu0 %v2471
    %v2473 = vand.u32 %v130, 4294901760
    %v2474 = vsub.f32 %v130, %v2473
    %v2475 = vand.u32 %v2474, 4294901760
    %2476 = vmatpush.msra.mxu0 %v2475
    %v2477 = vand.u32 %v129, 4294901760
    %v2478 = vsub.f32 %v129, %v2477
    %v2479 = vand.u32 %v2478, 4294901760
    %2480 = vmatpush.msra.mxu0 %v2479
    %v2481 = vand.u32 %v128, 4294901760
    %v2482 = vsub.f32 %v128, %v2481
    %v2483 = vand.u32 %v2482, 4294901760
    %2484 = vmatpush.msra.mxu0 %v2483
    %v2485 = vand.u32 %v127, 4294901760
    %v2486 = vsub.f32 %v127, %v2485
    %v2487 = vand.u32 %v2486, 4294901760
    %2488 = vmatpush.msra.mxu0 %v2487
    %v2489 = vand.u32 %v126, 4294901760
    %v2490 = vsub.f32 %v126, %v2489
    %v2491 = vand.u32 %v2490, 4294901760
    %2492 = vmatpush.msra.mxu0 %v2491
    %v2493 = vand.u32 %v125, 4294901760
    %v2494 = vsub.f32 %v125, %v2493
    %v2495 = vand.u32 %v2494, 4294901760
    %2496 = vmatpush.msra.mxu0 %v2495
    %v2497 = vand.u32 %v124, 4294901760
    %v2498 = vsub.f32 %v124, %v2497
    %v2499 = vand.u32 %v2498, 4294901760
    %2500 = vmatpush.msra.mxu0 %v2499
    %v2501 = vand.u32 %v123, 4294901760
    %v2502 = vsub.f32 %v123, %v2501
    %v2503 = vand.u32 %v2502, 4294901760
    %2504 = vmatpush.msra.mxu0 %v2503
    %v2505 = vand.u32 %v122, 4294901760
    %v2506 = vsub.f32 %v122, %v2505
    %v2507 = vand.u32 %v2506, 4294901760
    %2508 = vmatpush.msra.mxu0 %v2507
    %v2509 = vand.u32 %v121, 4294901760
    %v2510 = vsub.f32 %v121, %v2509
    %v2511 = vand.u32 %v2510, 4294901760
    %2512 = vmatpush.msra.mxu0 %v2511
    %v2513 = vand.u32 %v120, 4294901760
    %v2514 = vsub.f32 %v120, %v2513
    %v2515 = vand.u32 %v2514, 4294901760
    %2516 = vmatpush.msra.mxu0 %v2515
    %v2517 = vand.u32 %v21, 4294901760
    %2518 = vmatmul.f32.gmra.mxu0 %v2517
    %v2519 = vpop.f32.mrf.mxu0
    %v2520 = vadd.f32 %v2451, %v2519
    %2521 = vdwg.mxu0
    %v2522 = vand.u32 %v135, 4294901760
    %2523 = vmatpush.msra.mxu0 %v2522
    %v2524 = vand.u32 %v134, 4294901760
    %2525 = vmatpush.msra.mxu0 %v2524
    %v2526 = vand.u32 %v133, 4294901760
    %2527 = vmatpush.msra.mxu0 %v2526
    %v2528 = vand.u32 %v132, 4294901760
    %2529 = vmatpush.msra.mxu0 %v2528
    %v2530 = vand.u32 %v131, 4294901760
    %2531 = vmatpush.msra.mxu0 %v2530
    %v2532 = vand.u32 %v130, 4294901760
    %2533 = vmatpush.msra.mxu0 %v2532
    %v2534 = vand.u32 %v129, 4294901760
    %2535 = vmatpush.msra.mxu0 %v2534
    %v2536 = vand.u32 %v128, 4294901760
    %2537 = vmatpush.msra.mxu0 %v2536
    %v2538 = vand.u32 %v127, 4294901760
    %2539 = vmatpush.msra.mxu0 %v2538
    %v2540 = vand.u32 %v126, 4294901760
    %2541 = vmatpush.msra.mxu0 %v2540
    %v2542 = vand.u32 %v125, 4294901760
    %2543 = vmatpush.msra.mxu0 %v2542
    %v2544 = vand.u32 %v124, 4294901760
    %2545 = vmatpush.msra.mxu0 %v2544
    %v2546 = vand.u32 %v123, 4294901760
    %2547 = vmatpush.msra.mxu0 %v2546
    %v2548 = vand.u32 %v122, 4294901760
    %2549 = vmatpush.msra.mxu0 %v2548
    %v2550 = vand.u32 %v121, 4294901760
    %2551 = vmatpush.msra.mxu0 %v2550
    %v2552 = vand.u32 %v120, 4294901760
    %2553 = vmatpush.msra.mxu0 %v2552
    %v2554 = vand.u32 %v21, 4294901760
    %2555 = vmatmul.f32.gmra.mxu0 %v2554
    %v2556 = vpop.f32.mrf.mxu0
    %v2557 = vadd.f32 %v2520, %v2556
    %2558 = vdwg.mxu0
    %v2559 = vand.u32 %v151, 4294901760
    %2560 = vmatpush.msra.mxu0 %v2559
    %v2561 = vand.u32 %v150, 4294901760
    %2562 = vmatpush.msra.mxu0 %v2561
    %v2563 = vand.u32 %v149, 4294901760
    %2564 = vmatpush.msra.mxu0 %v2563
    %v2565 = vand.u32 %v148, 4294901760
    %2566 = vmatpush.msra.mxu0 %v2565
    %v2567 = vand.u32 %v147, 4294901760
    %2568 = vmatpush.msra.mxu0 %v2567
    %v2569 = vand.u32 %v146, 4294901760
    %2570 = vmatpush.msra.mxu0 %v2569
    %v2571 = vand.u32 %v145, 4294901760
    %2572 = vmatpush.msra.mxu0 %v2571
    %v2573 = vand.u32 %v144, 4294901760
    %2574 = vmatpush.msra.mxu0 %v2573
    %v2575 = vand.u32 %v143, 4294901760
    %2576 = vmatpush.msra.mxu0 %v2575
    %v2577 = vand.u32 %v142, 4294901760
    %2578 = vmatpush.msra.mxu0 %v2577
    %v2579 = vand.u32 %v141, 4294901760
    %2580 = vmatpush.msra.mxu0 %v2579
    %v2581 = vand.u32 %v140, 4294901760
    %2582 = vmatpush.msra.mxu0 %v2581
    %v2583 = vand.u32 %v139, 4294901760
    %2584 = vmatpush.msra.mxu0 %v2583
    %v2585 = vand.u32 %v138, 4294901760
    %2586 = vmatpush.msra.mxu0 %v2585
    %v2587 = vand.u32 %v137, 4294901760
    %2588 = vmatpush.msra.mxu0 %v2587
    %v2589 = vand.u32 %v136, 4294901760
    %2590 = vmatpush.msra.mxu0 %v2589
    %v2591 = vand.u32 %v22, 4294901760
    %v2592 = vsub.f32 %v22, %v2591
    %v2593 = vand.u32 %v2592, 4294901760
    %v2594 = vsub.f32 %v2592, %v2593
    %v2595 = vand.u32 %v2594, 4294901760
    %2596 = vmatmul.f32.gmra.mxu0 %v2595
    %v2597 = vpop.f32.mrf.mxu0
    %v2598 = vadd.f32 %v2557, %v2597
    %2599 = vdwg.mxu0
    %v2600 = vand.u32 %v151, 4294901760
    %v2601 = vsub.f32 %v151, %v2600
    %v2602 = vand.u32 %v2601, 4294901760
    %v2603 = vsub.f32 %v2601, %v2602
    %v2604 = vand.u32 %v2603, 4294901760
    %2605 = vmatpush.msra.mxu0 %v2604
    %v2606 = vand.u32 %v150, 4294901760
    %v2607 = vsub.f32 %v150, %v2606
    %v2608 = vand.u32 %v2607, 4294901760
    %v2609 = vsub.f32 %v2607, %v2608
    %v2610 = vand.u32 %v2609, 4294901760
    %2611 = vmatpush.msra.mxu0 %v2610
    %v2612 = vand.u32 %v149, 4294901760
    %v2613 = vsub.f32 %v149, %v2612
    %v2614 = vand.u32 %v2613, 4294901760
    %v2615 = vsub.f32 %v2613, %v2614
    %v2616 = vand.u32 %v2615, 4294901760
    %2617 = vmatpush.msra.mxu0 %v2616
    %v2618 = vand.u32 %v148, 4294901760
    %v2619 = vsub.f32 %v148, %v2618
    %v2620 = vand.u32 %v2619, 4294901760
    %v2621 = vsub.f32 %v2619, %v2620
    %v2622 = vand.u32 %v2621, 4294901760
    %2623 = vmatpush.msra.mxu0 %v2622
    %v2624 = vand.u32 %v147, 4294901760
    %v2625 = vsub.f32 %v147, %v2624
    %v2626 = vand.u32 %v2625, 4294901760
    %v2627 = vsub.f32 %v2625, %v2626
    %v2628 = vand.u32 %v2627, 4294901760
    %2629 = vmatpush.msra.mxu0 %v2628
    %v2630 = vand.u32 %v146, 4294901760
    %v2631 = vsub.f32 %v146, %v2630
    %v2632 = vand.u32 %v2631, 4294901760
    %v2633 = vsub.f32 %v2631, %v2632
    %v2634 = vand.u32 %v2633, 4294901760
    %2635 = vmatpush.msra.mxu0 %v2634
    %v2636 = vand.u32 %v145, 4294901760
    %v2637 = vsub.f32 %v145, %v2636
    %v2638 = vand.u32 %v2637, 4294901760
    %v2639 = vsub.f32 %v2637, %v2638
    %v2640 = vand.u32 %v2639, 4294901760
    %2641 = vmatpush.msra.mxu0 %v2640
    %v2642 = vand.u32 %v144, 4294901760
    %v2643 = vsub.f32 %v144, %v2642
    %v2644 = vand.u32 %v2643, 4294901760
    %v2645 = vsub.f32 %v2643, %v2644
    %v2646 = vand.u32 %v2645, 4294901760
    %2647 = vmatpush.msra.mxu0 %v2646
    %v2648 = vand.u32 %v143, 4294901760
    %v2649 = vsub.f32 %v143, %v2648
    %v2650 = vand.u32 %v2649, 4294901760
    %v2651 = vsub.f32 %v2649, %v2650
    %v2652 = vand.u32 %v2651, 4294901760
    %2653 = vmatpush.msra.mxu0 %v2652
    %v2654 = vand.u32 %v142, 4294901760
    %v2655 = vsub.f32 %v142, %v2654
    %v2656 = vand.u32 %v2655, 4294901760
    %v2657 = vsub.f32 %v2655, %v2656
    %v2658 = vand.u32 %v2657, 4294901760
    %2659 = vmatpush.msra.mxu0 %v2658
    %v2660 = vand.u32 %v141, 4294901760
    %v2661 = vsub.f32 %v141, %v2660
    %v2662 = vand.u32 %v2661, 4294901760
    %v2663 = vsub.f32 %v2661, %v2662
    %v2664 = vand.u32 %v2663, 4294901760
    %2665 = vmatpush.msra.mxu0 %v2664
    %v2666 = vand.u32 %v140, 4294901760
    %v2667 = vsub.f32 %v140, %v2666
    %v2668 = vand.u32 %v2667, 4294901760
    %v2669 = vsub.f32 %v2667, %v2668
    %v2670 = vand.u32 %v2669, 4294901760
    %2671 = vmatpush.msra.mxu0 %v2670
    %v2672 = vand.u32 %v139, 4294901760
    %v2673 = vsub.f32 %v139, %v2672
    %v2674 = vand.u32 %v2673, 4294901760
    %v2675 = vsub.f32 %v2673, %v2674
    %v2676 = vand.u32 %v2675, 4294901760
    %2677 = vmatpush.msra.mxu0 %v2676
    %v2678 = vand.u32 %v138, 4294901760
    %v2679 = vsub.f32 %v138, %v2678
    %v2680 = vand.u32 %v2679, 4294901760
    %v2681 = vsub.f32 %v2679, %v2680
    %v2682 = vand.u32 %v2681, 4294901760
    %2683 = vmatpush.msra.mxu0 %v2682
    %v2684 = vand.u32 %v137, 4294901760
    %v2685 = vsub.f32 %v137, %v2684
    %v2686 = vand.u32 %v2685, 4294901760
    %v2687 = vsub.f32 %v2685, %v2686
    %v2688 = vand.u32 %v2687, 4294901760
    %2689 = vmatpush.msra.mxu0 %v2688
    %v2690 = vand.u32 %v136, 4294901760
    %v2691 = vsub.f32 %v136, %v2690
    %v2692 = vand.u32 %v2691, 4294901760
    %v2693 = vsub.f32 %v2691, %v2692
    %v2694 = vand.u32 %v2693, 4294901760
    %2695 = vmatpush.msra.mxu0 %v2694
    %v2696 = vand.u32 %v22, 4294901760
    %2697 = vmatmul.f32.gmra.mxu0 %v2696
    %v2698 = vpop.f32.mrf.mxu0
    %v2699 = vadd.f32 %v2598, %v2698
    %2700 = vdwg.mxu0
    %v2701 = vand.u32 %v151, 4294901760
    %v2702 = vsub.f32 %v151, %v2701
    %2703 = vmatpush.msra.mxu0 %v2702
    %v2704 = vand.u32 %v150, 4294901760
    %v2705 = vsub.f32 %v150, %v2704
    %2706 = vmatpush.msra.mxu0 %v2705
    %v2707 = vand.u32 %v149, 4294901760
    %v2708 = vsub.f32 %v149, %v2707
    %2709 = vmatpush.msra.mxu0 %v2708
    %v2710 = vand.u32 %v148, 4294901760
    %v2711 = vsub.f32 %v148, %v2710
    %2712 = vmatpush.msra.mxu0 %v2711
    %v2713 = vand.u32 %v147, 4294901760
    %v2714 = vsub.f32 %v147, %v2713
    %2715 = vmatpush.msra.mxu0 %v2714
    %v2716 = vand.u32 %v146, 4294901760
    %v2717 = vsub.f32 %v146, %v2716
    %2718 = vmatpush.msra.mxu0 %v2717
    %v2719 = vand.u32 %v145, 4294901760
    %v2720 = vsub.f32 %v145, %v2719
    %2721 = vmatpush.msra.mxu0 %v2720
    %v2722 = vand.u32 %v144, 4294901760
    %v2723 = vsub.f32 %v144, %v2722
    %2724 = vmatpush.msra.mxu0 %v2723
    %v2725 = vand.u32 %v143, 4294901760
    %v2726 = vsub.f32 %v143, %v2725
    %2727 = vmatpush.msra.mxu0 %v2726
    %v2728 = vand.u32 %v142, 4294901760
    %v2729 = vsub.f32 %v142, %v2728
    %2730 = vmatpush.msra.mxu0 %v2729
    %v2731 = vand.u32 %v141, 4294901760
    %v2732 = vsub.f32 %v141, %v2731
    %2733 = vmatpush.msra.mxu0 %v2732
    %v2734 = vand.u32 %v140, 4294901760
    %v2735 = vsub.f32 %v140, %v2734
    %2736 = vmatpush.msra.mxu0 %v2735
    %v2737 = vand.u32 %v139, 4294901760
    %v2738 = vsub.f32 %v139, %v2737
    %2739 = vmatpush.msra.mxu0 %v2738
    %v2740 = vand.u32 %v138, 4294901760
    %v2741 = vsub.f32 %v138, %v2740
    %2742 = vmatpush.msra.mxu0 %v2741
    %v2743 = vand.u32 %v137, 4294901760
    %v2744 = vsub.f32 %v137, %v2743
    %2745 = vmatpush.msra.mxu0 %v2744
    %v2746 = vand.u32 %v136, 4294901760
    %v2747 = vsub.f32 %v136, %v2746
    %2748 = vmatpush.msra.mxu0 %v2747
    %v2749 = vand.u32 %v22, 4294901760
    %v2750 = vsub.f32 %v22, %v2749
    %2751 = vmatmul.f32.gmra.mxu0 %v2750
    %v2752 = vpop.f32.mrf.mxu0
    %v2753 = vadd.f32 %v2699, %v2752
    %2754 = vdwg.mxu0
    %v2755 = vand.u32 %v151, 4294901760
    %2756 = vmatpush.msra.mxu0 %v2755
    %v2757 = vand.u32 %v150, 4294901760
    %2758 = vmatpush.msra.mxu0 %v2757
    %v2759 = vand.u32 %v149, 4294901760
    %2760 = vmatpush.msra.mxu0 %v2759
    %v2761 = vand.u32 %v148, 4294901760
    %2762 = vmatpush.msra.mxu0 %v2761
    %v2763 = vand.u32 %v147, 4294901760
    %2764 = vmatpush.msra.mxu0 %v2763
    %v2765 = vand.u32 %v146, 4294901760
    %2766 = vmatpush.msra.mxu0 %v2765
    %v2767 = vand.u32 %v145, 4294901760
    %2768 = vmatpush.msra.mxu0 %v2767
    %v2769 = vand.u32 %v144, 4294901760
    %2770 = vmatpush.msra.mxu0 %v2769
    %v2771 = vand.u32 %v143, 4294901760
    %2772 = vmatpush.msra.mxu0 %v2771
    %v2773 = vand.u32 %v142, 4294901760
    %2774 = vmatpush.msra.mxu0 %v2773
    %v2775 = vand.u32 %v141, 4294901760
    %2776 = vmatpush.msra.mxu0 %v2775
    %v2777 = vand.u32 %v140, 4294901760
    %2778 = vmatpush.msra.mxu0 %v2777
    %v2779 = vand.u32 %v139, 4294901760
    %2780 = vmatpush.msra.mxu0 %v2779
    %v2781 = vand.u32 %v138, 4294901760
    %2782 = vmatpush.msra.mxu0 %v2781
    %v2783 = vand.u32 %v137, 4294901760
    %2784 = vmatpush.msra.mxu0 %v2783
    %v2785 = vand.u32 %v136, 4294901760
    %2786 = vmatpush.msra.mxu0 %v2785
    %v2787 = vand.u32 %v22, 4294901760
    %v2788 = vsub.f32 %v22, %v2787
    %v2789 = vand.u32 %v2788, 4294901760
    %2790 = vmatmul.f32.gmra.mxu0 %v2789
    %v2791 = vpop.f32.mrf.mxu0
    %v2792 = vadd.f32 %v2753, %v2791
    %2793 = vdwg.mxu0
    %v2794 = vand.u32 %v151, 4294901760
    %v2795 = vsub.f32 %v151, %v2794
    %v2796 = vand.u32 %v2795, 4294901760
    %2797 = vmatpush.msra.mxu0 %v2796
    %v2798 = vand.u32 %v150, 4294901760
    %v2799 = vsub.f32 %v150, %v2798
    %v2800 = vand.u32 %v2799, 4294901760
    %2801 = vmatpush.msra.mxu0 %v2800
    %v2802 = vand.u32 %v149, 4294901760
    %v2803 = vsub.f32 %v149, %v2802
    %v2804 = vand.u32 %v2803, 4294901760
    %2805 = vmatpush.msra.mxu0 %v2804
    %v2806 = vand.u32 %v148, 4294901760
    %v2807 = vsub.f32 %v148, %v2806
    %v2808 = vand.u32 %v2807, 4294901760
    %2809 = vmatpush.msra.mxu0 %v2808
    %v2810 = vand.u32 %v147, 4294901760
    %v2811 = vsub.f32 %v147, %v2810
    %v2812 = vand.u32 %v2811, 4294901760
    %2813 = vmatpush.msra.mxu0 %v2812
    %v2814 = vand.u32 %v146, 4294901760
    %v2815 = vsub.f32 %v146, %v2814
    %v2816 = vand.u32 %v2815, 4294901760
    %2817 = vmatpush.msra.mxu0 %v2816
    %v2818 = vand.u32 %v145, 4294901760
    %v2819 = vsub.f32 %v145, %v2818
    %v2820 = vand.u32 %v2819, 4294901760
    %2821 = vmatpush.msra.mxu0 %v2820
    %v2822 = vand.u32 %v144, 4294901760
    %v2823 = vsub.f32 %v144, %v2822
    %v2824 = vand.u32 %v2823, 4294901760
    %2825 = vmatpush.msra.mxu0 %v2824
    %v2826 = vand.u32 %v143, 4294901760
    %v2827 = vsub.f32 %v143, %v2826
    %v2828 = vand.u32 %v2827, 4294901760
    %2829 = vmatpush.msra.mxu0 %v2828
    %v2830 = vand.u32 %v142, 4294901760
    %v2831 = vsub.f32 %v142, %v2830
    %v2832 = vand.u32 %v2831, 4294901760
    %2833 = vmatpush.msra.mxu0 %v2832
    %v2834 = vand.u32 %v141, 4294901760
    %v2835 = vsub.f32 %v141, %v2834
    %v2836 = vand.u32 %v2835, 4294901760
    %2837 = vmatpush.msra.mxu0 %v2836
    %v2838 = vand.u32 %v140, 4294901760
    %v2839 = vsub.f32 %v140, %v2838
    %v2840 = vand.u32 %v2839, 4294901760
    %2841 = vmatpush.msra.mxu0 %v2840
    %v2842 = vand.u32 %v139, 4294901760
    %v2843 = vsub.f32 %v139, %v2842
    %v2844 = vand.u32 %v2843, 4294901760
    %2845 = vmatpush.msra.mxu0 %v2844
    %v2846 = vand.u32 %v138, 4294901760
    %v2847 = vsub.f32 %v138, %v2846
    %v2848 = vand.u32 %v2847, 4294901760
    %2849 = vmatpush.msra.mxu0 %v2848
    %v2850 = vand.u32 %v137, 4294901760
    %v2851 = vsub.f32 %v137, %v2850
    %v2852 = vand.u32 %v2851, 4294901760
    %2853 = vmatpush.msra.mxu0 %v2852
    %v2854 = vand.u32 %v136, 4294901760
    %v2855 = vsub.f32 %v136, %v2854
    %v2856 = vand.u32 %v2855, 4294901760
    %2857 = vmatpush.msra.mxu0 %v2856
    %v2858 = vand.u32 %v22, 4294901760
    %2859 = vmatmul.f32.gmra.mxu0 %v2858
    %v2860 = vpop.f32.mrf.mxu0
    %v2861 = vadd.f32 %v2792, %v2860
    %2862 = vdwg.mxu0
    %v2863 = vand.u32 %v151, 4294901760
    %2864 = vmatpush.msra.mxu0 %v2863
    %v2865 = vand.u32 %v150, 4294901760
    %2866 = vmatpush.msra.mxu0 %v2865
    %v2867 = vand.u32 %v149, 4294901760
    %2868 = vmatpush.msra.mxu0 %v2867
    %v2869 = vand.u32 %v148, 4294901760
    %2870 = vmatpush.msra.mxu0 %v2869
    %v2871 = vand.u32 %v147, 4294901760
    %2872 = vmatpush.msra.mxu0 %v2871
    %v2873 = vand.u32 %v146, 4294901760
    %2874 = vmatpush.msra.mxu0 %v2873
    %v2875 = vand.u32 %v145, 4294901760
    %2876 = vmatpush.msra.mxu0 %v2875
    %v2877 = vand.u32 %v144, 4294901760
    %2878 = vmatpush.msra.mxu0 %v2877
    %v2879 = vand.u32 %v143, 4294901760
    %2880 = vmatpush.msra.mxu0 %v2879
    %v2881 = vand.u32 %v142, 4294901760
    %2882 = vmatpush.msra.mxu0 %v2881
    %v2883 = vand.u32 %v141, 4294901760
    %2884 = vmatpush.msra.mxu0 %v2883
    %v2885 = vand.u32 %v140, 4294901760
    %2886 = vmatpush.msra.mxu0 %v2885
    %v2887 = vand.u32 %v139, 4294901760
    %2888 = vmatpush.msra.mxu0 %v2887
    %v2889 = vand.u32 %v138, 4294901760
    %2890 = vmatpush.msra.mxu0 %v2889
    %v2891 = vand.u32 %v137, 4294901760
    %2892 = vmatpush.msra.mxu0 %v2891
    %v2893 = vand.u32 %v136, 4294901760
    %2894 = vmatpush.msra.mxu0 %v2893
    %v2895 = vand.u32 %v22, 4294901760
    %2896 = vmatmul.f32.gmra.mxu0 %v2895
    %v2897 = vpop.f32.mrf.mxu0
    %v2898 = vadd.f32 %v2861, %v2897
    %2899 = vdwg.mxu0
    %v2900 = vand.u32 %v167, 4294901760
    %2901 = vmatpush.msra.mxu0 %v2900
    %v2902 = vand.u32 %v166, 4294901760
    %2903 = vmatpush.msra.mxu0 %v2902
    %v2904 = vand.u32 %v165, 4294901760
    %2905 = vmatpush.msra.mxu0 %v2904
    %v2906 = vand.u32 %v164, 4294901760
    %2907 = vmatpush.msra.mxu0 %v2906
    %v2908 = vand.u32 %v163, 4294901760
    %2909 = vmatpush.msra.mxu0 %v2908
    %v2910 = vand.u32 %v162, 4294901760
    %2911 = vmatpush.msra.mxu0 %v2910
    %v2912 = vand.u32 %v161, 4294901760
    %2913 = vmatpush.msra.mxu0 %v2912
    %v2914 = vand.u32 %v160, 4294901760
    %2915 = vmatpush.msra.mxu0 %v2914
    %v2916 = vand.u32 %v159, 4294901760
    %2917 = vmatpush.msra.mxu0 %v2916
    %v2918 = vand.u32 %v158, 4294901760
    %2919 = vmatpush.msra.mxu0 %v2918
    %v2920 = vand.u32 %v157, 4294901760
    %2921 = vmatpush.msra.mxu0 %v2920
    %v2922 = vand.u32 %v156, 4294901760
    %2923 = vmatpush.msra.mxu0 %v2922
    %v2924 = vand.u32 %v155, 4294901760
    %2925 = vmatpush.msra.mxu0 %v2924
    %v2926 = vand.u32 %v154, 4294901760
    %2927 = vmatpush.msra.mxu0 %v2926
    %v2928 = vand.u32 %v153, 4294901760
    %2929 = vmatpush.msra.mxu0 %v2928
    %v2930 = vand.u32 %v152, 4294901760
    %2931 = vmatpush.msra.mxu0 %v2930
    %v2932 = vand.u32 %v23, 4294901760
    %v2933 = vsub.f32 %v23, %v2932
    %v2934 = vand.u32 %v2933, 4294901760
    %v2935 = vsub.f32 %v2933, %v2934
    %v2936 = vand.u32 %v2935, 4294901760
    %2937 = vmatmul.f32.gmra.mxu0 %v2936
    %v2938 = vpop.f32.mrf.mxu0
    %v2939 = vadd.f32 %v2898, %v2938
    %2940 = vdwg.mxu0
    %v2941 = vand.u32 %v167, 4294901760
    %v2942 = vsub.f32 %v167, %v2941
    %v2943 = vand.u32 %v2942, 4294901760
    %v2944 = vsub.f32 %v2942, %v2943
    %v2945 = vand.u32 %v2944, 4294901760
    %2946 = vmatpush.msra.mxu0 %v2945
    %v2947 = vand.u32 %v166, 4294901760
    %v2948 = vsub.f32 %v166, %v2947
    %v2949 = vand.u32 %v2948, 4294901760
    %v2950 = vsub.f32 %v2948, %v2949
    %v2951 = vand.u32 %v2950, 4294901760
    %2952 = vmatpush.msra.mxu0 %v2951
    %v2953 = vand.u32 %v165, 4294901760
    %v2954 = vsub.f32 %v165, %v2953
    %v2955 = vand.u32 %v2954, 4294901760
    %v2956 = vsub.f32 %v2954, %v2955
    %v2957 = vand.u32 %v2956, 4294901760
    %2958 = vmatpush.msra.mxu0 %v2957
    %v2959 = vand.u32 %v164, 4294901760
    %v2960 = vsub.f32 %v164, %v2959
    %v2961 = vand.u32 %v2960, 4294901760
    %v2962 = vsub.f32 %v2960, %v2961
    %v2963 = vand.u32 %v2962, 4294901760
    %2964 = vmatpush.msra.mxu0 %v2963
    %v2965 = vand.u32 %v163, 4294901760
    %v2966 = vsub.f32 %v163, %v2965
    %v2967 = vand.u32 %v2966, 4294901760
    %v2968 = vsub.f32 %v2966, %v2967
    %v2969 = vand.u32 %v2968, 4294901760
    %2970 = vmatpush.msra.mxu0 %v2969
    %v2971 = vand.u32 %v162, 4294901760
    %v2972 = vsub.f32 %v162, %v2971
    %v2973 = vand.u32 %v2972, 4294901760
    %v2974 = vsub.f32 %v2972, %v2973
    %v2975 = vand.u32 %v2974, 4294901760
    %2976 = vmatpush.msra.mxu0 %v2975
    %v2977 = vand.u32 %v161, 4294901760
    %v2978 = vsub.f32 %v161, %v2977
    %v2979 = vand.u32 %v2978, 4294901760
    %v2980 = vsub.f32 %v2978, %v2979
    %v2981 = vand.u32 %v2980, 4294901760
    %2982 = vmatpush.msra.mxu0 %v2981
    %v2983 = vand.u32 %v160, 4294901760
    %v2984 = vsub.f32 %v160, %v2983
    %v2985 = vand.u32 %v2984, 4294901760
    %v2986 = vsub.f32 %v2984, %v2985
    %v2987 = vand.u32 %v2986, 4294901760
    %2988 = vmatpush.msra.mxu0 %v2987
    %v2989 = vand.u32 %v159, 4294901760
    %v2990 = vsub.f32 %v159, %v2989
    %v2991 = vand.u32 %v2990, 4294901760
    %v2992 = vsub.f32 %v2990, %v2991
    %v2993 = vand.u32 %v2992, 4294901760
    %2994 = vmatpush.msra.mxu0 %v2993
    %v2995 = vand.u32 %v158, 4294901760
    %v2996 = vsub.f32 %v158, %v2995
    %v2997 = vand.u32 %v2996, 4294901760
    %v2998 = vsub.f32 %v2996, %v2997
    %v2999 = vand.u32 %v2998, 4294901760
    %3000 = vmatpush.msra.mxu0 %v2999
    %v3001 = vand.u32 %v157, 4294901760
    %v3002 = vsub.f32 %v157, %v3001
    %v3003 = vand.u32 %v3002, 4294901760
    %v3004 = vsub.f32 %v3002, %v3003
    %v3005 = vand.u32 %v3004, 4294901760
    %3006 = vmatpush.msra.mxu0 %v3005
    %v3007 = vand.u32 %v156, 4294901760
    %v3008 = vsub.f32 %v156, %v3007
    %v3009 = vand.u32 %v3008, 4294901760
    %v3010 = vsub.f32 %v3008, %v3009
    %v3011 = vand.u32 %v3010, 4294901760
    %3012 = vmatpush.msra.mxu0 %v3011
    %v3013 = vand.u32 %v155, 4294901760
    %v3014 = vsub.f32 %v155, %v3013
    %v3015 = vand.u32 %v3014, 4294901760
    %v3016 = vsub.f32 %v3014, %v3015
    %v3017 = vand.u32 %v3016, 4294901760
    %3018 = vmatpush.msra.mxu0 %v3017
    %v3019 = vand.u32 %v154, 4294901760
    %v3020 = vsub.f32 %v154, %v3019
    %v3021 = vand.u32 %v3020, 4294901760
    %v3022 = vsub.f32 %v3020, %v3021
    %v3023 = vand.u32 %v3022, 4294901760
    %3024 = vmatpush.msra.mxu0 %v3023
    %v3025 = vand.u32 %v153, 4294901760
    %v3026 = vsub.f32 %v153, %v3025
    %v3027 = vand.u32 %v3026, 4294901760
    %v3028 = vsub.f32 %v3026, %v3027
    %v3029 = vand.u32 %v3028, 4294901760
    %3030 = vmatpush.msra.mxu0 %v3029
    %v3031 = vand.u32 %v152, 4294901760
    %v3032 = vsub.f32 %v152, %v3031
    %v3033 = vand.u32 %v3032, 4294901760
    %v3034 = vsub.f32 %v3032, %v3033
    %v3035 = vand.u32 %v3034, 4294901760
    %3036 = vmatpush.msra.mxu0 %v3035
    %v3037 = vand.u32 %v23, 4294901760
    %3038 = vmatmul.f32.gmra.mxu0 %v3037
    %v3039 = vpop.f32.mrf.mxu0
    %v3040 = vadd.f32 %v2939, %v3039
    %3041 = vdwg.mxu0
    %v3042 = vand.u32 %v167, 4294901760
    %v3043 = vsub.f32 %v167, %v3042
    %3044 = vmatpush.msra.mxu0 %v3043
    %v3045 = vand.u32 %v166, 4294901760
    %v3046 = vsub.f32 %v166, %v3045
    %3047 = vmatpush.msra.mxu0 %v3046
    %v3048 = vand.u32 %v165, 4294901760
    %v3049 = vsub.f32 %v165, %v3048
    %3050 = vmatpush.msra.mxu0 %v3049
    %v3051 = vand.u32 %v164, 4294901760
    %v3052 = vsub.f32 %v164, %v3051
    %3053 = vmatpush.msra.mxu0 %v3052
    %v3054 = vand.u32 %v163, 4294901760
    %v3055 = vsub.f32 %v163, %v3054
    %3056 = vmatpush.msra.mxu0 %v3055
    %v3057 = vand.u32 %v162, 4294901760
    %v3058 = vsub.f32 %v162, %v3057
    %3059 = vmatpush.msra.mxu0 %v3058
    %v3060 = vand.u32 %v161, 4294901760
    %v3061 = vsub.f32 %v161, %v3060
    %3062 = vmatpush.msra.mxu0 %v3061
    %v3063 = vand.u32 %v160, 4294901760
    %v3064 = vsub.f32 %v160, %v3063
    %3065 = vmatpush.msra.mxu0 %v3064
    %v3066 = vand.u32 %v159, 4294901760
    %v3067 = vsub.f32 %v159, %v3066
    %3068 = vmatpush.msra.mxu0 %v3067
    %v3069 = vand.u32 %v158, 4294901760
    %v3070 = vsub.f32 %v158, %v3069
    %3071 = vmatpush.msra.mxu0 %v3070
    %v3072 = vand.u32 %v157, 4294901760
    %v3073 = vsub.f32 %v157, %v3072
    %3074 = vmatpush.msra.mxu0 %v3073
    %v3075 = vand.u32 %v156, 4294901760
    %v3076 = vsub.f32 %v156, %v3075
    %3077 = vmatpush.msra.mxu0 %v3076
    %v3078 = vand.u32 %v155, 4294901760
    %v3079 = vsub.f32 %v155, %v3078
    %3080 = vmatpush.msra.mxu0 %v3079
    %v3081 = vand.u32 %v154, 4294901760
    %v3082 = vsub.f32 %v154, %v3081
    %3083 = vmatpush.msra.mxu0 %v3082
    %v3084 = vand.u32 %v153, 4294901760
    %v3085 = vsub.f32 %v153, %v3084
    %3086 = vmatpush.msra.mxu0 %v3085
    %v3087 = vand.u32 %v152, 4294901760
    %v3088 = vsub.f32 %v152, %v3087
    %3089 = vmatpush.msra.mxu0 %v3088
    %v3090 = vand.u32 %v23, 4294901760
    %v3091 = vsub.f32 %v23, %v3090
    %3092 = vmatmul.f32.gmra.mxu0 %v3091
    %v3093 = vpop.f32.mrf.mxu0
    %v3094 = vadd.f32 %v3040, %v3093
    %3095 = vdwg.mxu0
    %v3096 = vand.u32 %v167, 4294901760
    %3097 = vmatpush.msra.mxu0 %v3096
    %v3098 = vand.u32 %v166, 4294901760
    %3099 = vmatpush.msra.mxu0 %v3098
    %v3100 = vand.u32 %v165, 4294901760
    %3101 = vmatpush.msra.mxu0 %v3100
    %v3102 = vand.u32 %v164, 4294901760
    %3103 = vmatpush.msra.mxu0 %v3102
    %v3104 = vand.u32 %v163, 4294901760
    %3105 = vmatpush.msra.mxu0 %v3104
    %v3106 = vand.u32 %v162, 4294901760
    %3107 = vmatpush.msra.mxu0 %v3106
    %v3108 = vand.u32 %v161, 4294901760
    %3109 = vmatpush.msra.mxu0 %v3108
    %v3110 = vand.u32 %v160, 4294901760
    %3111 = vmatpush.msra.mxu0 %v3110
    %v3112 = vand.u32 %v159, 4294901760
    %3113 = vmatpush.msra.mxu0 %v3112
    %v3114 = vand.u32 %v158, 4294901760
    %3115 = vmatpush.msra.mxu0 %v3114
    %v3116 = vand.u32 %v157, 4294901760
    %3117 = vmatpush.msra.mxu0 %v3116
    %v3118 = vand.u32 %v156, 4294901760
    %3119 = vmatpush.msra.mxu0 %v3118
    %v3120 = vand.u32 %v155, 4294901760
    %3121 = vmatpush.msra.mxu0 %v3120
    %v3122 = vand.u32 %v154, 4294901760
    %3123 = vmatpush.msra.mxu0 %v3122
    %v3124 = vand.u32 %v153, 4294901760
    %3125 = vmatpush.msra.mxu0 %v3124
    %v3126 = vand.u32 %v152, 4294901760
    %3127 = vmatpush.msra.mxu0 %v3126
    %v3128 = vand.u32 %v23, 4294901760
    %v3129 = vsub.f32 %v23, %v3128
    %v3130 = vand.u32 %v3129, 4294901760
    %3131 = vmatmul.f32.gmra.mxu0 %v3130
    %v3132 = vpop.f32.mrf.mxu0
    %v3133 = vadd.f32 %v3094, %v3132
    %3134 = vdwg.mxu0
    %v3135 = vand.u32 %v167, 4294901760
    %v3136 = vsub.f32 %v167, %v3135
    %v3137 = vand.u32 %v3136, 4294901760
    %3138 = vmatpush.msra.mxu0 %v3137
    %v3139 = vand.u32 %v166, 4294901760
    %v3140 = vsub.f32 %v166, %v3139
    %v3141 = vand.u32 %v3140, 4294901760
    %3142 = vmatpush.msra.mxu0 %v3141
    %v3143 = vand.u32 %v165, 4294901760
    %v3144 = vsub.f32 %v165, %v3143
    %v3145 = vand.u32 %v3144, 4294901760
    %3146 = vmatpush.msra.mxu0 %v3145
    %v3147 = vand.u32 %v164, 4294901760
    %v3148 = vsub.f32 %v164, %v3147
    %v3149 = vand.u32 %v3148, 4294901760
    %3150 = vmatpush.msra.mxu0 %v3149
    %v3151 = vand.u32 %v163, 4294901760
    %v3152 = vsub.f32 %v163, %v3151
    %v3153 = vand.u32 %v3152, 4294901760
    %3154 = vmatpush.msra.mxu0 %v3153
    %v3155 = vand.u32 %v162, 4294901760
    %v3156 = vsub.f32 %v162, %v3155
    %v3157 = vand.u32 %v3156, 4294901760
    %3158 = vmatpush.msra.mxu0 %v3157
    %v3159 = vand.u32 %v161, 4294901760
    %v3160 = vsub.f32 %v161, %v3159
    %v3161 = vand.u32 %v3160, 4294901760
    %3162 = vmatpush.msra.mxu0 %v3161
    %v3163 = vand.u32 %v160, 4294901760
    %v3164 = vsub.f32 %v160, %v3163
    %v3165 = vand.u32 %v3164, 4294901760
    %3166 = vmatpush.msra.mxu0 %v3165
    %v3167 = vand.u32 %v159, 4294901760
    %v3168 = vsub.f32 %v159, %v3167
    %v3169 = vand.u32 %v3168, 4294901760
    %3170 = vmatpush.msra.mxu0 %v3169
    %v3171 = vand.u32 %v158, 4294901760
    %v3172 = vsub.f32 %v158, %v3171
    %v3173 = vand.u32 %v3172, 4294901760
    %3174 = vmatpush.msra.mxu0 %v3173
    %v3175 = vand.u32 %v157, 4294901760
    %v3176 = vsub.f32 %v157, %v3175
    %v3177 = vand.u32 %v3176, 4294901760
    %3178 = vmatpush.msra.mxu0 %v3177
    %v3179 = vand.u32 %v156, 4294901760
    %v3180 = vsub.f32 %v156, %v3179
    %v3181 = vand.u32 %v3180, 4294901760
    %3182 = vmatpush.msra.mxu0 %v3181
    %v3183 = vand.u32 %v155, 4294901760
    %v3184 = vsub.f32 %v155, %v3183
    %v3185 = vand.u32 %v3184, 4294901760
    %3186 = vmatpush.msra.mxu0 %v3185
    %v3187 = vand.u32 %v154, 4294901760
    %v3188 = vsub.f32 %v154, %v3187
    %v3189 = vand.u32 %v3188, 4294901760
    %3190 = vmatpush.msra.mxu0 %v3189
    %v3191 = vand.u32 %v153, 4294901760
    %v3192 = vsub.f32 %v153, %v3191
    %v3193 = vand.u32 %v3192, 4294901760
    %3194 = vmatpush.msra.mxu0 %v3193
    %v3195 = vand.u32 %v152, 4294901760
    %v3196 = vsub.f32 %v152, %v3195
    %v3197 = vand.u32 %v3196, 4294901760
    %3198 = vmatpush.msra.mxu0 %v3197
    %v3199 = vand.u32 %v23, 4294901760
    %3200 = vmatmul.f32.gmra.mxu0 %v3199
    %v3201 = vpop.f32.mrf.mxu0
    %v3202 = vadd.f32 %v3133, %v3201
    %3203 = vdwg.mxu0
    %v3204 = vand.u32 %v167, 4294901760
    %3205 = vmatpush.msra.mxu0 %v3204
    %v3206 = vand.u32 %v166, 4294901760
    %3207 = vmatpush.msra.mxu0 %v3206
    %v3208 = vand.u32 %v165, 4294901760
    %3209 = vmatpush.msra.mxu0 %v3208
    %v3210 = vand.u32 %v164, 4294901760
    %3211 = vmatpush.msra.mxu0 %v3210
    %v3212 = vand.u32 %v163, 4294901760
    %3213 = vmatpush.msra.mxu0 %v3212
    %v3214 = vand.u32 %v162, 4294901760
    %3215 = vmatpush.msra.mxu0 %v3214
    %v3216 = vand.u32 %v161, 4294901760
    %3217 = vmatpush.msra.mxu0 %v3216
    %v3218 = vand.u32 %v160, 4294901760
    %3219 = vmatpush.msra.mxu0 %v3218
    %v3220 = vand.u32 %v159, 4294901760
    %3221 = vmatpush.msra.mxu0 %v3220
    %v3222 = vand.u32 %v158, 4294901760
    %3223 = vmatpush.msra.mxu0 %v3222
    %v3224 = vand.u32 %v157, 4294901760
    %3225 = vmatpush.msra.mxu0 %v3224
    %v3226 = vand.u32 %v156, 4294901760
    %3227 = vmatpush.msra.mxu0 %v3226
    %v3228 = vand.u32 %v155, 4294901760
    %3229 = vmatpush.msra.mxu0 %v3228
    %v3230 = vand.u32 %v154, 4294901760
    %3231 = vmatpush.msra.mxu0 %v3230
    %v3232 = vand.u32 %v153, 4294901760
    %3233 = vmatpush.msra.mxu0 %v3232
    %v3234 = vand.u32 %v152, 4294901760
    %3235 = vmatpush.msra.mxu0 %v3234
    %v3236 = vand.u32 %v23, 4294901760
    %3237 = vmatmul.f32.gmra.mxu0 %v3236
    %v3238 = vpop.f32.mrf.mxu0
    %v3239 = vadd.f32 %v3202, %v3238
    %3240 = vdwg.mxu0
    %vm3241 = vcmask 48128
    %3242 = vst.msk [vmem:[#allocation2] sm:$0xff] %vm3241, %v3239
    // Predicated region
    $region14: #{tpu_custom_call.1} parent=1 // pred_check
      _
    $region15: #{tpu_custom_call.1} parent=1 // pred_check_branch
      %3244 = sbr.rel (0) target = $region17
    $region16: #{tpu_custom_call.1} parent=1 // pred_region
      %3246 = vsyncadd [#allocation3], 0
      %s3248 = sshll.u32 [#allocation2], 4
      %s3249 = int_to_ptr.vmem [resolvable:$true] %s3248
      %s3250 = sshll.u32 %s3, 4
      %s3251 = int_to_ptr.hbm [resolvable:$true] %s3250
      %3253 = dma.vmem_to_hbm [thread:$0]  %s3249, 128, %s3251, [#allocation3]
    $region17: #{tpu_custom_call.1} parent=1 // pred_fallthru
      _
    // Predicated region
    $region18: #{tpu_custom_call.1} parent=1 // pred_check
      _
    $region19: #{tpu_custom_call.1} parent=1 // pred_check_branch
      %3255 = sbr.rel (0) target = $region21
    $region20: #{tpu_custom_call.1} parent=1 // pred_region
      %3257 = dma.done [#allocation3], 128
    $region21: #{tpu_custom_call.1} parent=1 // pred_fallthru
      _
    %3258 = vsyncpa [#allocation3], 1

</llo_original>
